<compile_context>
chip_gen: v7x
topology: tpu7x:2x2x1
jax: 0.10.0
libtpu: 0.0.40
codegen_flags: <defaults>
</compile_context>

<pallas_src>
import functools
import math

import jax
import jax.numpy as jnp
from jax import lax
from jax.experimental import pallas as pl
from jax.experimental.pallas import tpu as pltpu


def _round_up(x, m):
    return (x + m - 1) // m * m


def _embed_kernel(ids_ref, tok_tab_ref, pos_ref, out_ref, *, pack, k_chunk,
                  precision):
    """Computes one (Ts/pack, pack*D) output block.

    token term    : one-hot(ids) @ token_table on the MXU (fp32 accumulation,
                    exact for 0/1 one-hot), K-chunked over the vocab.
    position term : resident per-block slab added on the VPU (no gather/matmul).
    """
    tab_dtype = tok_tab_ref.dtype
    v_pad, d = tok_tab_ref.shape
    rows = out_ref.shape[0]                      # Ts // pack
    num_k = v_pad // k_chunk

    ids = ids_ref[...]                           # (rows, pack) int32
    # Single hoisted lane-iota; per K-chunk we shift the (rows, 1) id column
    # instead of re-offsetting the full iota (review: cheaper one-hot, no select).
    base_col = lax.broadcasted_iota(jnp.int32, (rows, k_chunk), 1)

    for p in range(pack):                        # pack <= 4, static unroll
        idcol = ids[:, p:p + 1]                  # (rows, 1)

        if num_k == 1:
            one_hot = (base_col == idcol).astype(tab_dtype)
            piece = jnp.dot(one_hot, tok_tab_ref[...],
                            preferred_element_type=jnp.float32,
                            precision=precision)
        else:
            # K-chunked gather bounds one-hot / iota temporaries for large vocab.
            def body(kc, acc):
                start = pl.multiple_of(kc * k_chunk, k_chunk)
                one_hot = (base_col == (idcol - kc * k_chunk)).astype(tab_dtype)
                return acc + jnp.dot(one_hot,
                                     tok_tab_ref[pl.ds(start, k_chunk), :],
                                     preferred_element_type=jnp.float32,
                                     precision=precision)

            piece = lax.fori_loop(0, num_k, body,
                                  jnp.zeros((rows, d), jnp.float32))

        piece = piece + pos_ref[:, p * d:(p + 1) * d].astype(jnp.float32)
        # TODO(synk): apply training-mode dropout here (pltpu.prng_seed +
        # pltpu.prng_random_bits) before the store; eval mode is identity.
        out_ref[:, p * d:(p + 1) * d] = piece.astype(out_ref.dtype)


def embedding_layer(x_ids, token_table, pos_table, *, rows_per_step=512,
                    out_dtype=jnp.float32):
    """Token embedding + sinusoidal position embedding (+ eval-mode dropout).

    x_ids:       (B, S) int32 token ids.
    token_table: (V, D) float32 or bfloat16 embedding table.
    pos_table:   (max_len, D) same family, sinusoidal table (max_len >= S).
    Returns (B, S, D) in `out_dtype` (fp32 default = PyTorch module semantics).

    rows_per_step: tokens per grid step along S.  512 is safe on v7x (64 MiB
    VMEM); v5e/v6e can go 1024-2048 for better HBM-roofline efficiency.
    """
    B, S = x_ids.shape
    V, D = token_table.shape
    max_len, d2 = pos_table.shape
    assert d2 == D and S <= max_len

    # Lane-packing: P tokens share one 128-lane output row when D divides 128.
    P = 128 // D if (D < 128 and 128 % D == 0) else 1

    row_q = 8 * P                                   # keep (rows / P) a multiple of 8
    Ts = _round_up(min(max(rows_per_step, row_q), S), row_q)
    S_pad = _round_up(S, Ts)
    n_sb = S_pad // Ts
    Tsp = Ts // P

    # Vocab K-chunking (and pad vocab so the chunk size divides the table rows).
    k_chunk = min(_round_up(V, 8), 512)
    V_pad = _round_up(V, k_chunk)

    # nn.Embedding would raise on out-of-range ids; we clamp (documented delta).
    ids = jnp.clip(x_ids.astype(jnp.int32), 0, V - 1)
    ids = jnp.pad(ids, ((0, 0), (0, S_pad - S)))
    ids2 = ids.reshape(B * S_pad // P, P)

    tok_tab = token_table
    if V_pad != V:
        tok_tab = jnp.pad(token_table, ((0, V_pad - V), (0, 0)))

    # Pre-packed position slab (S_pad/P, P*D): streamed per S-block, added on the
    # VPU.  No kron, no per-call (V, D)-sized copies.
    pos_slab = jnp.pad(pos_table[:S], ((0, S_pad - S), (0, 0)))
    pos_slab = pos_slab.reshape(S_pad // P, P * D)

    itab = jnp.dtype(tok_tab.dtype).itemsize
    ipos = jnp.dtype(pos_slab.dtype).itemsize
    iout = jnp.dtype(out_dtype).itemsize

    # Per-TensorCore VMEM budget (megacore duplicates the resident table per TC):
    #   resident token table (double-buffered constant block) + streamed blocks +
    #   in-kernel temporaries (iota, one-hot, bool compare, fp32 accumulators).
    tab_bytes = V_pad * D * itab
    resident = 2 * tab_bytes
    stream = 2 * (Tsp * P * 4 + Tsp * P * D * ipos + Tsp * P * D * iout)
    temps = (Tsp * k_chunk * (4 + itab + 1)
             + 2 * Tsp * D * 4
             + Tsp * P * D * 4)
    vmem_need = resident + stream + temps
    if vmem_need > (44 << 20):
        # TODO(synk): pl.ANY + make_async_copy DMA row-gather path for large V*D.
        raise ValueError("embedding table too large for the VMEM-resident path")
    vmem_limit = int(min(max(vmem_need + (4 << 20), 16 << 20), 48 << 20))

    precision = (lax.Precision.HIGHEST
                 if jnp.dtype(tok_tab.dtype) == jnp.dtype(jnp.float32) else None)

    out_packed = pl.pallas_call(
        functools.partial(_embed_kernel, pack=P, k_chunk=k_chunk,
                          precision=precision),
        out_shape=jax.ShapeDtypeStruct((B * S_pad // P, P * D), out_dtype),
        # Grid: (S-blocks, batch); batch innermost so the position slab block is
        # fetched once per S-block (same block index across consecutive steps).
        grid=(n_sb, B),
        in_specs=[
            pl.BlockSpec((Tsp, P), lambda j, b: (b * n_sb + j, 0)),      # token ids
            pl.BlockSpec((V_pad, D), lambda j, b: (0, 0)),               # resident table
            pl.BlockSpec((Tsp, P * D), lambda j, b: (j, 0)),             # position slab
        ],
        out_specs=pl.BlockSpec((Tsp, P * D), lambda j, b: (b * n_sb + j, 0)),
        compiler_params=pltpu.CompilerParams(
            dimension_semantics=("parallel", "parallel"),
            vmem_limit_bytes=vmem_limit),
    )(ids2, tok_tab, pos_slab)

    # Free row-major un-pack: (B*S_pad/P, P*D) -> (B, S_pad, D) -> (B, S, D).
    return out_packed.reshape(B, S_pad, D)[:, :S, :]


def make_position_table(max_len, embedding_dim):
    """Same construction as PositionEmbedding.__init__ (sin on even, cos on odd)."""
    pos = jnp.arange(0, max_len, dtype=jnp.float32)[:, None]
    div_term = jnp.exp(jnp.arange(0, embedding_dim, 2, dtype=jnp.float32)
                       * (-math.log(10000.0) / embedding_dim))
    emb = jnp.zeros((max_len, embedding_dim), dtype=jnp.float32)
    emb = emb.at[:, 0::2].set(jnp.sin(pos * div_term))
    emb = emb.at[:, 1::2].set(jnp.cos(pos * div_term))
    return emb


if __name__ == "__main__":
    # Small shapes consistent with the module's forward.
    B, S = 2, 8
    max_len = 16
    embedding_dim = 32
    num_embeddings = 64

    key = jax.random.PRNGKey(0)
    k_ids, k_w = jax.random.split(key)

    token_table = jax.random.normal(k_w, (num_embeddings, embedding_dim),
                                    dtype=jnp.float32)
    pos_table = make_position_table(max_len, embedding_dim)
    x_ids = jax.random.randint(k_ids, (B, S), 0, num_embeddings, dtype=jnp.int32)

    # fp32 tables / fp32 output: matches the PyTorch module's eval() forward.
    out = jax.block_until_ready(embedding_layer(x_ids, token_table, pos_table))
    ref = token_table[x_ids] + pos_table[:S][None, :, :]
    assert out.shape == (B, S, embedding_dim)
    assert out.dtype == jnp.float32
    assert jnp.allclose(out, ref, atol=1e-5, rtol=1e-5), "fp32 mismatch vs reference"

    # Recommended perf configuration: bf16 table storage (half the resident VMEM
    # and HBM traffic; the one-hot gather stays exact, accumulation/add in fp32).
    tok_bf16 = token_table.astype(jnp.bfloat16)
    pos_bf16 = pos_table.astype(jnp.bfloat16)
    out_bf = jax.block_until_ready(embedding_layer(x_ids, tok_bf16, pos_bf16))
    ref_bf = (tok_bf16.astype(jnp.float32)[x_ids]
              + pos_bf16[:S].astype(jnp.float32)[None, :, :])
    assert jnp.allclose(out_bf, ref_bf, atol=1e-5, rtol=1e-5), "bf16 mismatch vs reference"

    print("KERNEL_OK")
</pallas_src>

<mosaic_0001>
module attributes {stable_mosaic.version = 11 : i64} {
  func.func @_embed_kernel(%arg0: i32, %arg1: i32, %arg2: memref<8x4xi32, #tpu.memory_space<vmem>>, %arg3: memref<64x32xf32, #tpu.memory_space<vmem>>, %arg4: memref<8x128xf32, #tpu.memory_space<vmem>>, %arg5: memref<8x128xf32, #tpu.memory_space<vmem>>) attributes {dimension_semantics = [#tpu.dimension_semantics<parallel>, #tpu.dimension_semantics<parallel>], iteration_bounds = array<i64: 1, 2>, scalar_prefetch = 0 : i64, scratch_operands = 0 : i64, tpu.core_type = #tpu.core_type<tc>, window_params = [{transform_indices = @transform_0, window_bounds = array<i64: 8, 4>}, {pipeline_mode = #tpu.pipeline_mode<synchronous>, transform_indices = @transform_1, window_bounds = array<i64: 64, 32>}, {transform_indices = @transform_2, window_bounds = array<i64: 8, 128>}, {transform_indices = @transform_3, window_bounds = array<i64: 8, 128>}]} {
    %c0 = arith.constant 0 : index
    %c0_0 = arith.constant 0 : index
    %0 = vector.load %arg2[%c0, %c0_0] : memref<8x4xi32, #tpu.memory_space<vmem>>, vector<8x4xi32>
    %1 = tpu.iota {dimensions = array<i32: 1>} : vector<8x64xi32>
    %2 = vector.extract_strided_slice %0 {offsets = [0, 0], sizes = [8, 1], strides = [1, 1]} : vector<8x4xi32> to vector<8x1xi32>
    %3 = vector.broadcast %2 : vector<8x1xi32> to vector<8x64xi32>
    %4 = arith.cmpi eq, %1, %3 : vector<8x64xi32>
    %5 = arith.extui %4 : vector<8x64xi1> to vector<8x64xi32>
    %6 = arith.sitofp %5 : vector<8x64xi32> to vector<8x64xf32>
    %c0_1 = arith.constant 0 : index
    %c0_2 = arith.constant 0 : index
    %7 = vector.load %arg3[%c0_1, %c0_2] : memref<64x32xf32, #tpu.memory_space<vmem>>, vector<64x32xf32>
    %cst = arith.constant dense<0.000000e+00> : vector<8x32xf32>
    %8 = tpu.matmul %6, %7, %cst {dimension_numbers = #tpu.dot_dimension_numbers<[1], [0], [0], [1], [0, 0, 1, 1], [], []>, precision = #tpu.contract_precision<fp32>} : vector<8x64xf32>, vector<64x32xf32>, vector<8x32xf32> -> vector<8x32xf32>
    %c0_3 = arith.constant 0 : index
    %c0_4 = arith.constant 0 : index
    %9 = vector.load %arg4[%c0_3, %c0_4] : memref<8x128xf32, #tpu.memory_space<vmem>>, vector<8x32xf32>
    %10 = arith.addf %8, %9 : vector<8x32xf32>
    %c0_5 = arith.constant 0 : index
    %c0_6 = arith.constant 0 : index
    %11 = vector.load %arg5[%c0_5, %c0_6] : memref<8x128xf32, #tpu.memory_space<vmem>>, vector<8x32xf32>
    tpu.vector_store %arg5[%c0_5, %c0_6], %10 {strides = array<i32>} : memref<8x128xf32, #tpu.memory_space<vmem>>, vector<8x32xf32>,
    %12 = vector.extract_strided_slice %0 {offsets = [0, 1], sizes = [8, 1], strides = [1, 1]} : vector<8x4xi32> to vector<8x1xi32>
    %13 = vector.broadcast %12 : vector<8x1xi32> to vector<8x64xi32>
    %14 = arith.cmpi eq, %1, %13 : vector<8x64xi32>
    %15 = arith.extui %14 : vector<8x64xi1> to vector<8x64xi32>
    %16 = arith.sitofp %15 : vector<8x64xi32> to vector<8x64xf32>
    %c0_7 = arith.constant 0 : index
    %c0_8 = arith.constant 0 : index
    %17 = vector.load %arg3[%c0_7, %c0_8] : memref<64x32xf32, #tpu.memory_space<vmem>>, vector<64x32xf32>
    %cst_9 = arith.constant dense<0.000000e+00> : vector<8x32xf32>
    %18 = tpu.matmul %16, %17, %cst_9 {dimension_numbers = #tpu.dot_dimension_numbers<[1], [0], [0], [1], [0, 0, 1, 1], [], []>, precision = #tpu.contract_precision<fp32>} : vector<8x64xf32>, vector<64x32xf32>, vector<8x32xf32> -> vector<8x32xf32>
    %c0_10 = arith.constant 0 : index
    %c32 = arith.constant 32 : index
    %19 = vector.load %arg4[%c0_10, %c32] : memref<8x128xf32, #tpu.memory_space<vmem>>, vector<8x32xf32>
    %20 = arith.addf %18, %19 : vector<8x32xf32>
    %c0_11 = arith.constant 0 : index
    %c32_12 = arith.constant 32 : index
    %21 = vector.load %arg5[%c0_11, %c32_12] : memref<8x128xf32, #tpu.memory_space<vmem>>, vector<8x32xf32>
    tpu.vector_store %arg5[%c0_11, %c32_12], %20 {strides = array<i32>} : memref<8x128xf32, #tpu.memory_space<vmem>>, vector<8x32xf32>,
    %22 = vector.extract_strided_slice %0 {offsets = [0, 2], sizes = [8, 1], strides = [1, 1]} : vector<8x4xi32> to vector<8x1xi32>
    %23 = vector.broadcast %22 : vector<8x1xi32> to vector<8x64xi32>
    %24 = arith.cmpi eq, %1, %23 : vector<8x64xi32>
    %25 = arith.extui %24 : vector<8x64xi1> to vector<8x64xi32>
    %26 = arith.sitofp %25 : vector<8x64xi32> to vector<8x64xf32>
    %c0_13 = arith.constant 0 : index
    %c0_14 = arith.constant 0 : index
    %27 = vector.load %arg3[%c0_13, %c0_14] : memref<64x32xf32, #tpu.memory_space<vmem>>, vector<64x32xf32>
    %cst_15 = arith.constant dense<0.000000e+00> : vector<8x32xf32>
    %28 = tpu.matmul %26, %27, %cst_15 {dimension_numbers = #tpu.dot_dimension_numbers<[1], [0], [0], [1], [0, 0, 1, 1], [], []>, precision = #tpu.contract_precision<fp32>} : vector<8x64xf32>, vector<64x32xf32>, vector<8x32xf32> -> vector<8x32xf32>
    %c0_16 = arith.constant 0 : index
    %c64 = arith.constant 64 : index
    %29 = vector.load %arg4[%c0_16, %c64] : memref<8x128xf32, #tpu.memory_space<vmem>>, vector<8x32xf32>
    %30 = arith.addf %28, %29 : vector<8x32xf32>
    %c0_17 = arith.constant 0 : index
    %c64_18 = arith.constant 64 : index
    %31 = vector.load %arg5[%c0_17, %c64_18] : memref<8x128xf32, #tpu.memory_space<vmem>>, vector<8x32xf32>
    tpu.vector_store %arg5[%c0_17, %c64_18], %30 {strides = array<i32>} : memref<8x128xf32, #tpu.memory_space<vmem>>, vector<8x32xf32>,
    %32 = vector.extract_strided_slice %0 {offsets = [0, 3], sizes = [8, 1], strides = [1, 1]} : vector<8x4xi32> to vector<8x1xi32>
    %33 = vector.broadcast %32 : vector<8x1xi32> to vector<8x64xi32>
    %34 = arith.cmpi eq, %1, %33 : vector<8x64xi32>
    %35 = arith.extui %34 : vector<8x64xi1> to vector<8x64xi32>
    %36 = arith.sitofp %35 : vector<8x64xi32> to vector<8x64xf32>
    %c0_19 = arith.constant 0 : index
    %c0_20 = arith.constant 0 : index
    %37 = vector.load %arg3[%c0_19, %c0_20] : memref<64x32xf32, #tpu.memory_space<vmem>>, vector<64x32xf32>
    %cst_21 = arith.constant dense<0.000000e+00> : vector<8x32xf32>
    %38 = tpu.matmul %36, %37, %cst_21 {dimension_numbers = #tpu.dot_dimension_numbers<[1], [0], [0], [1], [0, 0, 1, 1], [], []>, precision = #tpu.contract_precision<fp32>} : vector<8x64xf32>, vector<64x32xf32>, vector<8x32xf32> -> vector<8x32xf32>
    %c0_22 = arith.constant 0 : index
    %c96 = arith.constant 96 : index
    %39 = vector.load %arg4[%c0_22, %c96] : memref<8x128xf32, #tpu.memory_space<vmem>>, vector<8x32xf32>
    %40 = arith.addf %38, %39 : vector<8x32xf32>
    %c0_23 = arith.constant 0 : index
    %c96_24 = arith.constant 96 : index
    %41 = vector.load %arg5[%c0_23, %c96_24] : memref<8x128xf32, #tpu.memory_space<vmem>>, vector<8x32xf32>
    tpu.vector_store %arg5[%c0_23, %c96_24], %40 {strides = array<i32>} : memref<8x128xf32, #tpu.memory_space<vmem>>, vector<8x32xf32>,
    return
  }
  func.func @transform_0(%arg0: i32, %arg1: i32) -> (i32, i32) {
    %c1_i32 = arith.constant 1 : i32
    %0 = arith.muli %arg1, %c1_i32 : i32
    %1 = arith.addi %0, %arg0 : i32
    %c0_i32 = arith.constant 0 : i32
    %c0_i32_0 = arith.constant 0 : i32
    return %1, %c0_i32 : i32, i32
  }
  func.func @transform_1(%arg0: i32, %arg1: i32) -> (i32, i32) {
    %c0_i32 = arith.constant 0 : i32
    %c0_i32_0 = arith.constant 0 : i32
    %c0_i32_1 = arith.constant 0 : i32
    return %c0_i32, %c0_i32_0 : i32, i32
  }
  func.func @transform_2(%arg0: i32, %arg1: i32) -> (i32, i32) {
    %c0_i32 = arith.constant 0 : i32
    %c0_i32_0 = arith.constant 0 : i32
    return %arg0, %c0_i32 : i32, i32
  }
  func.func @transform_3(%arg0: i32, %arg1: i32) -> (i32, i32) {
    %c1_i32 = arith.constant 1 : i32
    %0 = arith.muli %arg1, %c1_i32 : i32
    %1 = arith.addi %0, %arg0 : i32
    %c0_i32 = arith.constant 0 : i32
    %c0_i32_0 = arith.constant 0 : i32
    return %1, %c0_i32 : i32, i32
  }
}

</mosaic_0001>

<llo_original>
// kernel: tpu_custom_call.1
$region0: #{tpu_custom_call.1}
  #allocation0 [shape = 'u32[]', space=smem, size = 0x4, offset = 0x4, fixed_abs, tag = 'smem constant byte address 0x4 - core index']
  #allocation1 [shape = 'u32[144,128]{1,0:T(1,128)}', space=vmem, size = 0x12000, scoped, tag = 'internal scratch']
  %s0 = inlined_call_operand.vmem [shape: s32[16,4], index: 0, kind: input, shape index: {}]
  %s1 = inlined_call_operand.vmem [shape: f32[64,32], index: 1, kind: input, shape index: {}]
  %s2 = inlined_call_operand.vmem [shape: f32[8,128], index: 2, kind: input, shape index: {}]
  %s3 = inlined_call_operand.hbm [shape: f32[16,128], index: 3, kind: output, shape index: {}]
  %s4 = sld [smem:[#allocation0]]
  $region45: #{tpu_custom_call.1} parent=0
    _
  %s6 = ssub.s32 1, %s4
  %s7 = scalar_select 0, %s6, %s4
  $region1: #{tpu_custom_call.1} parent=0
    #allocation2 [shape = 'u8[8192]{0}', space=vmem, size = 0x2000, scoped, tag = 'output window, operand 0']
    #allocation3 [shape = 's32[2]{0}', space=sflag, size = 0x8, scoped, tag = 'scoped memory for tpu_custom_call.1']
    %8 = vsyncpa [#allocation3], 0
    %s9 = scalar_lea.sflag [#allocation3], 1
    %10 = vsyncpa %s9, 0
    loop: start=0, step=1, limit=4
    $region2: #{tpu_custom_call.1} parent=1 // loop_pre_header
      _
    $region3: #{tpu_custom_call.1} parent=1 // loop_header
      %s12 = sphi 0, %s16
      %p13 = scmp.ge.s32.totalorder %s12, 4
      %s19 = sphi 0, %s31
      %s20 = sphi 0, %s27
      %s21 = sphi 0, %s19
      %s22 = sphi 0, %s20
      %s23 = sphi 0, %s21
      %s24 = sphi 0, %s22
      %s36 = sphi 0, %s38
      %s39 = sphi 0, %s36
      %s40 = sphi 0, %s39
      %s56 = sphi 0, %s40
      %s60 = sphi 0, %s60
      %s62 = sphi 0, %s60
      %s63 = sphi 0, %s62
      %s77 = sphi 0, %s63
      %s83 = sphi 0, %s85
      %s86 = sphi 0, %s83
      %s87 = sphi 0, %s86
      %s103 = sphi 0, %s87
      %s111 = sphi 0, %s113
      %s114 = sphi 0, %s111
      %s115 = sphi 0, %s114
      %s131 = sphi 0, %s115
    $region4: #{tpu_custom_call.1} parent=1 // loop_header_branch
      %15 = sbr.rel (%p13) target = $region8
    $region5: #{tpu_custom_call.1} parent=1 // loop_body
      %s17 = ssub.s32 %s12, 1
      %s18 = ssub.s32 %s12, 2
      %s25 = sadd.s32 1, %s20
      %p26 = scmp.ge.s32.totalorder %s25, 2
      %s27 = scalar_select %p26, 0, %s25
      %s28 = sadd.s32 1, %s19
      %s29 = scalar_select %p26, %s28, %s19
      %p30 = scmp.ge.s32.totalorder %s29, 1
      %s31 = scalar_select %p30, 0, %s29
      %s32 = sadd.s32 %s20, %s19
      %s33 = sadd.s32 %s27, %s31
      %s34 = ssub.s32 %s32, %s33
      %p35 = scmp.eq.s32.totalorder %s34, 0
      %s37 = sadd.s32 %s36, 1
      %s38 = scalar_select %p35, %s36, %s37
      %p41 = pneg %p35
      %p42 = scmp.eq.s32.totalorder %s12, 1
      %p43 = por %p41, %p42
      %p44 = scmp.ne.s32.totalorder %s36, %s39
      %p45 = scmp.eq.s32.totalorder %s12, 0
      %p46 = por %p44, %p45
      %p47 = scmp.ne.s32.totalorder %s36, %s39
      %p48 = scmp.eq.s32.totalorder %s17, 1
      %p49 = por %p47, %p48
      %p50 = scmp.ne.s32.totalorder %s39, %s40
      %p51 = scmp.eq.s32.totalorder %s17, 0
      %p52 = por %p50, %p51
      %p53 = scmp.ne.s32.totalorder %s39, %s40
      %p54 = scmp.eq.s32.totalorder %s18, 1
      %p55 = por %p53, %p54
      %p57 = scmp.ne.s32.totalorder %s40, %s56
      %p58 = scmp.eq.s32.totalorder %s18, 0
      %p59 = por %p57, %p58
      %s61 = sadd.s32 %s60, 1
      %p64 = scmp.eq.s32.totalorder %s12, 1
      %p65 = scmp.ne.s32.totalorder %s60, %s62
      %p66 = scmp.eq.s32.totalorder %s12, 0
      %p67 = por %p65, %p66
      %p68 = scmp.ne.s32.totalorder %s60, %s62
      %p69 = scmp.eq.s32.totalorder %s17, 1
      %p70 = por %p68, %p69
      %p71 = scmp.ne.s32.totalorder %s62, %s63
      %p72 = scmp.eq.s32.totalorder %s17, 0
      %p73 = por %p71, %p72
      %p74 = scmp.ne.s32.totalorder %s62, %s63
      %p75 = scmp.eq.s32.totalorder %s18, 1
      %p76 = por %p74, %p75
      %p78 = scmp.ne.s32.totalorder %s63, %s77
      %p79 = scmp.eq.s32.totalorder %s18, 0
      %p80 = por %p78, %p79
      %s81 = ssub.s32 %s19, %s31
      %p82 = scmp.eq.s32.totalorder %s81, 0
      %s84 = sadd.s32 %s83, 1
      %s85 = scalar_select %p82, %s83, %s84
      %p88 = pneg %p82
      %p89 = scmp.eq.s32.totalorder %s12, 1
      %p90 = por %p88, %p89
      %p91 = scmp.ne.s32.totalorder %s83, %s86
      %p92 = scmp.eq.s32.totalorder %s12, 0
      %p93 = por %p91, %p92
      %p94 = scmp.ne.s32.totalorder %s83, %s86
      %p95 = scmp.eq.s32.totalorder %s17, 1
      %p96 = por %p94, %p95
      %p97 = scmp.ne.s32.totalorder %s86, %s87
      %p98 = scmp.eq.s32.totalorder %s17, 0
      %p99 = por %p97, %p98
      %p100 = scmp.ne.s32.totalorder %s86, %s87
      %p101 = scmp.eq.s32.totalorder %s18, 1
      %p102 = por %p100, %p101
      %p104 = scmp.ne.s32.totalorder %s87, %s103
      %p105 = scmp.eq.s32.totalorder %s18, 0
      %p106 = por %p104, %p105
      %s107 = sadd.s32 %s20, %s19
      %s108 = sadd.s32 %s27, %s31
      %s109 = ssub.s32 %s107, %s108
      %p110 = scmp.eq.s32.totalorder %s109, 0
      %s112 = sadd.s32 %s111, 1
      %s113 = scalar_select %p110, %s111, %s112
      %p116 = pneg %p110
      %p117 = scmp.eq.s32.totalorder %s12, 1
      %p118 = por %p116, %p117
      %p119 = scmp.ne.s32.totalorder %s111, %s114
      %p120 = scmp.eq.s32.totalorder %s12, 0
      %p121 = por %p119, %p120
      %p122 = scmp.ne.s32.totalorder %s111, %s114
      %p123 = scmp.eq.s32.totalorder %s17, 1
      %p124 = por %p122, %p123
      %p125 = scmp.ne.s32.totalorder %s114, %s115
      %p126 = scmp.eq.s32.totalorder %s17, 0
      %p127 = por %p125, %p126
      %p128 = scmp.ne.s32.totalorder %s114, %s115
      %p129 = scmp.eq.s32.totalorder %s18, 1
      %p130 = por %p128, %p129
      %p132 = scmp.ne.s32.totalorder %s115, %s131
      %p133 = scmp.eq.s32.totalorder %s18, 0
      %p134 = por %p132, %p133
      %p135 = scmp.le.s32.totalorder 1, %s12
      %p136 = scmp.lt.s32.totalorder %s12, 3
      %p137 = pnand %p135, %p136
      %p138 = pneg %p137
      // Predicated region
      $region9: #{tpu_custom_call.1} parent=5 // pred_check
        _
      $region10: #{tpu_custom_call.1} parent=5 // pred_check_branch
        %140 = sbr.rel (%p137) target = $region12
      $region11: #{tpu_custom_call.1} parent=5 // pred_region
        %s141 = ssub.s32 %s12, 1
        // Predicated region
        $region13: #{tpu_custom_call.1} parent=11 // pred_check
          %p142 = pneg %p73
        $region14: #{tpu_custom_call.1} parent=11 // pred_check_branch
          %144 = sbr.rel (%p142) target = $region16
        $region15: #{tpu_custom_call.1} parent=11 // pred_region
          _
        $region16: #{tpu_custom_call.1} parent=11 // pred_fallthru
          _
        // Predicated region
        $region17: #{tpu_custom_call.1} parent=11 // pred_check
          %p145 = pneg %p99
        $region18: #{tpu_custom_call.1} parent=11 // pred_check_branch
          %147 = sbr.rel (%p145) target = $region20
        $region19: #{tpu_custom_call.1} parent=11 // pred_region
          %p148 = scmp.lt.s32.totalorder %s21, 0
          %s149 = scalar_select %p148, %s21, 0
          %s150 = smul.addr %s149, 8
          %s151 = scalar_lea.vmem %s2, %s150
        $region20: #{tpu_custom_call.1} parent=11 // pred_fallthru
          _
      $region12: #{tpu_custom_call.1} parent=5 // pred_fallthru
        _
      %p152 = scmp.lt.s32.totalorder %s12, 2
      // Predicated region
      $region21: #{tpu_custom_call.1} parent=5 // pred_check
        %p153 = pneg %p152
      $region22: #{tpu_custom_call.1} parent=5 // pred_check_branch
        %155 = sbr.rel (%p153) target = $region24
      $region23: #{tpu_custom_call.1} parent=5 // pred_region
        // Predicated region
        $region25: #{tpu_custom_call.1} parent=23 // pred_check
          %p156 = pneg %p46
        $region26: #{tpu_custom_call.1} parent=23 // pred_check_branch
          %158 = sbr.rel (%p156) target = $region28
        $region27: #{tpu_custom_call.1} parent=23 // pred_region
          %s159 = sadd.s32 %s20, %s19
          %p160 = scmp.lt.s32.totalorder %s159, 1
          %s161 = scalar_select %p160, %s159, 1
          %s162 = smul.addr %s161, 8
          %s163 = scalar_lea.vmem %s0, %s162
          %s164 = sadd.s32 %s20, %s19
        $region28: #{tpu_custom_call.1} parent=23 // pred_fallthru
          _
      $region24: #{tpu_custom_call.1} parent=5 // pred_fallthru
        _
      %p165 = scmp.le.s32.totalorder 1, %s12
      %p166 = scmp.lt.s32.totalorder %s12, 3
      %p167 = pnand %p165, %p166
      %p168 = pneg %p167
      // Predicated region
      $region29: #{tpu_custom_call.1} parent=5 // pred_check
        _
      $region30: #{tpu_custom_call.1} parent=5 // pred_check_branch
        %170 = sbr.rel (%p167) target = $region32
      $region31: #{tpu_custom_call.1} parent=5 // pred_region
        %s171 = ssub.s32 %s12, 1
        %s172 = sadd.s32 %s22, %s21
        %p173 = scmp.lt.s32.totalorder %s172, 1
        %s174 = scalar_select %p173, %s172, 1
        %s175 = smul.addr %s174, 8
        %s176 = scalar_lea.vmem %s0, %s175
        %p177 = pneg %p52
        %p178 = pneg %p49
        %p179 = pneg %p73
        %p180 = pneg %p70
        %p181 = scmp.lt.s32.totalorder %s21, 0
        %s182 = scalar_select %p181, %s21, 0
        %s183 = smul.addr %s182, 8
        %s184 = scalar_lea.vmem %s2, %s183
        %p185 = pneg %p99
        %p186 = pneg %p96
        %p187 = pneg %p127
        %p188 = pneg %p124
        %s189 = sand.u32 %s114, 1
        %s190 = scalar_lea.sflag [#allocation3], %s189
        %s191 = sand.u32 %s114, 1
        %s192 = smul.addr %s191, 8
        %s193 = scalar_lea.vmem [#allocation2], %s192
        %s194 = sadd.s32 %s22, %s21
        %p195 = scmp.lt.s32.totalorder %s194, 1
        %s196 = scalar_select %p195, %s194, 1
        %s197 = smul.addr %s196, 8
        %s198 = scalar_lea.vmem %s0, %s197
        %s199 = sadd.s32 %s22, %s21
        %p200 = scmp.lt.s32.totalorder %s21, 0
        %s201 = scalar_select %p200, %s21, 0
        %s202 = smul.addr %s201, 8
        %s203 = scalar_lea.vmem %s2, %s202
        %s204 = sadd.s32 %s22, %s21
        %v205 = vld [vmem:[%s198] sm:$0xff]
        %v206 = vlaneseq
        %v207 = vand.u32 %v206, 127
        %208 = vset.pattern.permute.xlu0 0
        %209 = vperm.xlu0 %208, %v205
        %v210 = vpop.permute.xlu0 %209
        %vm211 = vcmp.eq.s32.totalorder %v207, %v210
        %v212 = vsel %vm211, 1, 0
        %v213 = vcvt.s32.f32 %v212
        %v214 = vld [vmem:[%s1] sm:$0xff]
        %v215 = vld [vmem:[%s1 + $0x8] sm:$0xff]
        %v216 = vld [vmem:[%s1 + $0x10] sm:$0xff]
        %v217 = vld [vmem:[%s1 + $0x18] sm:$0xff]
        %v218 = vld [vmem:[%s1 + $0x20] sm:$0xff]
        %v219 = vld [vmem:[%s1 + $0x28] sm:$0xff]
        %v220 = vld [vmem:[%s1 + $0x30] sm:$0xff]
        %v221 = vld [vmem:[%s1 + $0x38] sm:$0xff]
        %v222 = vld [vmem:[%s203] sm:$0xff]
        %vm223 = vcmask 523264
        %v225 = vsel %vm223, %v213, 0
        %227 = vmatprep.subr.mxu0 0.0
        %v228 = vand.u32 %v214, 4294901760
        %229 = vmatpush1.msra.mxu0 %v228
        %230 = vmatprep.subr.mxu0 0.0
        %v231 = vand.u32 %v215, 4294901760
        %232 = vmatpush1.msra.mxu0 %v231
        %233 = vmatprep.subr.mxu0 0.0
        %v234 = vand.u32 %v216, 4294901760
        %235 = vmatpush1.msra.mxu0 %v234
        %236 = vmatprep.subr.mxu0 0.0
        %v237 = vand.u32 %v217, 4294901760
        %238 = vmatpush1.msra.mxu0 %v237
        %239 = vmatprep.subr.mxu0 0.0
        %v240 = vand.u32 %v218, 4294901760
        %241 = vmatpush1.msra.mxu0 %v240
        %242 = vmatprep.subr.mxu0 0.0
        %v243 = vand.u32 %v219, 4294901760
        %244 = vmatpush1.msra.mxu0 %v243
        %245 = vmatprep.subr.mxu0 0.0
        %v246 = vand.u32 %v220, 4294901760
        %247 = vmatpush1.msra.mxu0 %v246
        %248 = vmatprep.subr.mxu0 0.0
        %v249 = vand.u32 %v221, 4294901760
        %250 = vmatpush1.msra.mxu0 %v249
        %251 = vmatprep.subr.mxu0 0.0
        %252 = vmatpush1.msra.mxu0 0.0
        %253 = vmatprep.subr.mxu0 0.0
        %254 = vmatpush1.msra.mxu0 0.0
        %255 = vmatprep.subr.mxu0 0.0
        %256 = vmatpush1.msra.mxu0 0.0
        %257 = vmatprep.subr.mxu0 0.0
        %258 = vmatpush1.msra.mxu0 0.0
        %259 = vmatprep.subr.mxu0 0.0
        %260 = vmatpush1.msra.mxu0 0.0
        %261 = vmatprep.subr.mxu0 0.0
        %262 = vmatpush1.msra.mxu0 0.0
        %263 = vmatprep.subr.mxu0 0.0
        %264 = vmatpush1.msra.mxu0 0.0
        %265 = vmatprep.subr.mxu0 0.0
        %266 = vmatpush1.msra.mxu0 0.0
        %267 = vmatprep.subr.mxu0 0.0
        %268 = vmatpush1.msra.mxu0 0.0
        %269 = vmatprep.subr.mxu0 0.0
        %270 = vmatpush1.msra.mxu0 0.0
        %271 = vmatprep.subr.mxu0 0.0
        %272 = vmatpush1.msra.mxu0 0.0
        %273 = vmatprep.subr.mxu0 0.0
        %274 = vmatpush1.msra.mxu0 0.0
        %275 = vmatprep.subr.mxu0 0.0
        %276 = vmatpush1.msra.mxu0 0.0
        %277 = vmatprep.subr.mxu0 0.0
        %278 = vmatpush1.msra.mxu0 0.0
        %279 = vmatprep.subr.mxu0 0.0
        %280 = vmatpush1.msra.mxu0 0.0
        %281 = vmatprep.subr.mxu0 0.0
        %282 = vmatpush1.msra.mxu0 0.0
        %283 = vmatprep.subr.mxu0 0.0
        %284 = vmatpush1.msra.mxu0 0.0
        %285 = vmatprep.subr.mxu0 0.0
        %286 = vmatpush1.msra.mxu0 0.0
        %287 = vmatprep.subr.mxu0 0.0
        %288 = vmatpush1.msra.mxu0 0.0
        %289 = vmatprep.subr.mxu0 0.0
        %290 = vmatpush1.msra.mxu0 0.0
        %291 = vmatprep.subr.mxu0 0.0
        %292 = vmatpush1.msra.mxu0 0.0
        %293 = vmatprep.subr.mxu0 0.0
        %294 = vmatpush1.msra.mxu0 0.0
        %295 = vmatprep.subr.mxu0 0.0
        %296 = vmatpush1.msra.mxu0 0.0
        %297 = vmatprep.subr.mxu0 0.0
        %298 = vmatpush1.msra.mxu0 0.0
        %299 = vmatprep.mubr.f32.mxu0 0.0
        %v300 = vand.u32 %v225, 4294901760
        %v301 = vsub.f32 %v225, %v300
        %v302 = vand.u32 %v301, 4294901760
        %v303 = vsub.f32 %v301, %v302
        %v304 = vand.u32 %v303, 4294901760
        %305 = vmatmul.mubr.f32.gmra.mrb[0].mxu0 %v304
        %v306 = vpop.f32.mrb[0].mxu0
        %v307 = vadd.f32 %v222, %v306
        %v308 = vpop.f32.mrb[0].mxu0
        %309 = vdwg.mxu0
        %310 = vmatprep.subr.mxu0 0.0
        %v311 = vand.u32 %v214, 4294901760
        %v312 = vsub.f32 %v214, %v311
        %v313 = vand.u32 %v312, 4294901760
        %v314 = vsub.f32 %v312, %v313
        %v315 = vand.u32 %v314, 4294901760
        %316 = vmatpush1.msra.mxu0 %v315
        %317 = vmatprep.subr.mxu0 0.0
        %v318 = vand.u32 %v215, 4294901760
        %v319 = vsub.f32 %v215, %v318
        %v320 = vand.u32 %v319, 4294901760
        %v321 = vsub.f32 %v319, %v320
        %v322 = vand.u32 %v321, 4294901760
        %323 = vmatpush1.msra.mxu0 %v322
        %324 = vmatprep.subr.mxu0 0.0
        %v325 = vand.u32 %v216, 4294901760
        %v326 = vsub.f32 %v216, %v325
        %v327 = vand.u32 %v326, 4294901760
        %v328 = vsub.f32 %v326, %v327
        %v329 = vand.u32 %v328, 4294901760
        %330 = vmatpush1.msra.mxu0 %v329
        %331 = vmatprep.subr.mxu0 0.0
        %v332 = vand.u32 %v217, 4294901760
        %v333 = vsub.f32 %v217, %v332
        %v334 = vand.u32 %v333, 4294901760
        %v335 = vsub.f32 %v333, %v334
        %v336 = vand.u32 %v335, 4294901760
        %337 = vmatpush1.msra.mxu0 %v336
        %338 = vmatprep.subr.mxu0 0.0
        %v339 = vand.u32 %v218, 4294901760
        %v340 = vsub.f32 %v218, %v339
        %v341 = vand.u32 %v340, 4294901760
        %v342 = vsub.f32 %v340, %v341
        %v343 = vand.u32 %v342, 4294901760
        %344 = vmatpush1.msra.mxu0 %v343
        %345 = vmatprep.subr.mxu0 0.0
        %v346 = vand.u32 %v219, 4294901760
        %v347 = vsub.f32 %v219, %v346
        %v348 = vand.u32 %v347, 4294901760
        %v349 = vsub.f32 %v347, %v348
        %v350 = vand.u32 %v349, 4294901760
        %351 = vmatpush1.msra.mxu0 %v350
        %352 = vmatprep.subr.mxu0 0.0
        %v353 = vand.u32 %v220, 4294901760
        %v354 = vsub.f32 %v220, %v353
        %v355 = vand.u32 %v354, 4294901760
        %v356 = vsub.f32 %v354, %v355
        %v357 = vand.u32 %v356, 4294901760
        %358 = vmatpush1.msra.mxu0 %v357
        %359 = vmatprep.subr.mxu0 0.0
        %v360 = vand.u32 %v221, 4294901760
        %v361 = vsub.f32 %v221, %v360
        %v362 = vand.u32 %v361, 4294901760
        %v363 = vsub.f32 %v361, %v362
        %v364 = vand.u32 %v363, 4294901760
        %365 = vmatpush1.msra.mxu0 %v364
        %366 = vmatprep.subr.mxu0 0.0
        %367 = vmatpush1.msra.mxu0 0.0
        %368 = vmatprep.subr.mxu0 0.0
        %369 = vmatpush1.msra.mxu0 0.0
        %370 = vmatprep.subr.mxu0 0.0
        %371 = vmatpush1.msra.mxu0 0.0
        %372 = vmatprep.subr.mxu0 0.0
        %373 = vmatpush1.msra.mxu0 0.0
        %374 = vmatprep.subr.mxu0 0.0
        %375 = vmatpush1.msra.mxu0 0.0
        %376 = vmatprep.subr.mxu0 0.0
        %377 = vmatpush1.msra.mxu0 0.0
        %378 = vmatprep.subr.mxu0 0.0
        %379 = vmatpush1.msra.mxu0 0.0
        %380 = vmatprep.subr.mxu0 0.0
        %381 = vmatpush1.msra.mxu0 0.0
        %382 = vmatprep.subr.mxu0 0.0
        %383 = vmatpush1.msra.mxu0 0.0
        %384 = vmatprep.subr.mxu0 0.0
        %385 = vmatpush1.msra.mxu0 0.0
        %386 = vmatprep.subr.mxu0 0.0
        %387 = vmatpush1.msra.mxu0 0.0
        %388 = vmatprep.subr.mxu0 0.0
        %389 = vmatpush1.msra.mxu0 0.0
        %390 = vmatprep.subr.mxu0 0.0
        %391 = vmatpush1.msra.mxu0 0.0
        %392 = vmatprep.subr.mxu0 0.0
        %393 = vmatpush1.msra.mxu0 0.0
        %394 = vmatprep.subr.mxu0 0.0
        %395 = vmatpush1.msra.mxu0 0.0
        %396 = vmatprep.subr.mxu0 0.0
        %397 = vmatpush1.msra.mxu0 0.0
        %398 = vmatprep.subr.mxu0 0.0
        %399 = vmatpush1.msra.mxu0 0.0
        %400 = vmatprep.subr.mxu0 0.0
        %401 = vmatpush1.msra.mxu0 0.0
        %402 = vmatprep.subr.mxu0 0.0
        %403 = vmatpush1.msra.mxu0 0.0
        %404 = vmatprep.subr.mxu0 0.0
        %405 = vmatpush1.msra.mxu0 0.0
        %406 = vmatprep.subr.mxu0 0.0
        %407 = vmatpush1.msra.mxu0 0.0
        %408 = vmatprep.subr.mxu0 0.0
        %409 = vmatpush1.msra.mxu0 0.0
        %410 = vmatprep.subr.mxu0 0.0
        %411 = vmatpush1.msra.mxu0 0.0
        %412 = vmatprep.subr.mxu0 0.0
        %413 = vmatpush1.msra.mxu0 0.0
        %414 = vmatprep.mubr.f32.mxu0 0.0
        %v415 = vand.u32 %v225, 4294901760
        %416 = vmatmul.mubr.f32.gmra.mrb[0].mxu0 %v415
        %v417 = vpop.f32.mrb[0].mxu0
        %v418 = vadd.f32 %v307, %v417
        %v419 = vpop.f32.mrb[0].mxu0
        %420 = vdwg.mxu0
        %421 = vmatprep.subr.mxu0 0.0
        %v422 = vand.u32 %v214, 4294901760
        %v423 = vsub.f32 %v214, %v422
        %424 = vmatpush1.msra.mxu0 %v423
        %425 = vmatprep.subr.mxu0 0.0
        %v426 = vand.u32 %v215, 4294901760
        %v427 = vsub.f32 %v215, %v426
        %428 = vmatpush1.msra.mxu0 %v427
        %429 = vmatprep.subr.mxu0 0.0
        %v430 = vand.u32 %v216, 4294901760
        %v431 = vsub.f32 %v216, %v430
        %432 = vmatpush1.msra.mxu0 %v431
        %433 = vmatprep.subr.mxu0 0.0
        %v434 = vand.u32 %v217, 4294901760
        %v435 = vsub.f32 %v217, %v434
        %436 = vmatpush1.msra.mxu0 %v435
        %437 = vmatprep.subr.mxu0 0.0
        %v438 = vand.u32 %v218, 4294901760
        %v439 = vsub.f32 %v218, %v438
        %440 = vmatpush1.msra.mxu0 %v439
        %441 = vmatprep.subr.mxu0 0.0
        %v442 = vand.u32 %v219, 4294901760
        %v443 = vsub.f32 %v219, %v442
        %444 = vmatpush1.msra.mxu0 %v443
        %445 = vmatprep.subr.mxu0 0.0
        %v446 = vand.u32 %v220, 4294901760
        %v447 = vsub.f32 %v220, %v446
        %448 = vmatpush1.msra.mxu0 %v447
        %449 = vmatprep.subr.mxu0 0.0
        %v450 = vand.u32 %v221, 4294901760
        %v451 = vsub.f32 %v221, %v450
        %452 = vmatpush1.msra.mxu0 %v451
        %453 = vmatprep.subr.mxu0 0.0
        %454 = vmatpush1.msra.mxu0 0.0
        %455 = vmatprep.subr.mxu0 0.0
        %456 = vmatpush1.msra.mxu0 0.0
        %457 = vmatprep.subr.mxu0 0.0
        %458 = vmatpush1.msra.mxu0 0.0
        %459 = vmatprep.subr.mxu0 0.0
        %460 = vmatpush1.msra.mxu0 0.0
        %461 = vmatprep.subr.mxu0 0.0
        %462 = vmatpush1.msra.mxu0 0.0
        %463 = vmatprep.subr.mxu0 0.0
        %464 = vmatpush1.msra.mxu0 0.0
        %465 = vmatprep.subr.mxu0 0.0
        %466 = vmatpush1.msra.mxu0 0.0
        %467 = vmatprep.subr.mxu0 0.0
        %468 = vmatpush1.msra.mxu0 0.0
        %469 = vmatprep.subr.mxu0 0.0
        %470 = vmatpush1.msra.mxu0 0.0
        %471 = vmatprep.subr.mxu0 0.0
        %472 = vmatpush1.msra.mxu0 0.0
        %473 = vmatprep.subr.mxu0 0.0
        %474 = vmatpush1.msra.mxu0 0.0
        %475 = vmatprep.subr.mxu0 0.0
        %476 = vmatpush1.msra.mxu0 0.0
        %477 = vmatprep.subr.mxu0 0.0
        %478 = vmatpush1.msra.mxu0 0.0
        %479 = vmatprep.subr.mxu0 0.0
        %480 = vmatpush1.msra.mxu0 0.0
        %481 = vmatprep.subr.mxu0 0.0
        %482 = vmatpush1.msra.mxu0 0.0
        %483 = vmatprep.subr.mxu0 0.0
        %484 = vmatpush1.msra.mxu0 0.0
        %485 = vmatprep.subr.mxu0 0.0
        %486 = vmatpush1.msra.mxu0 0.0
        %487 = vmatprep.subr.mxu0 0.0
        %488 = vmatpush1.msra.mxu0 0.0
        %489 = vmatprep.subr.mxu0 0.0
        %490 = vmatpush1.msra.mxu0 0.0
        %491 = vmatprep.subr.mxu0 0.0
        %492 = vmatpush1.msra.mxu0 0.0
        %493 = vmatprep.subr.mxu0 0.0
        %494 = vmatpush1.msra.mxu0 0.0
        %495 = vmatprep.subr.mxu0 0.0
        %496 = vmatpush1.msra.mxu0 0.0
        %497 = vmatprep.subr.mxu0 0.0
        %498 = vmatpush1.msra.mxu0 0.0
        %499 = vmatprep.subr.mxu0 0.0
        %500 = vmatpush1.msra.mxu0 0.0
        %501 = vmatprep.mubr.f32.mxu0 0.0
        %v502 = vand.u32 %v225, 4294901760
        %v503 = vsub.f32 %v225, %v502
        %504 = vmatmul.mubr.f32.gmra.mrb[0].mxu0 %v503
        %v505 = vpop.f32.mrb[0].mxu0
        %v506 = vadd.f32 %v418, %v505
        %v507 = vpop.f32.mrb[0].mxu0
        %508 = vdwg.mxu0
        %509 = vmatprep.subr.mxu0 0.0
        %v510 = vand.u32 %v214, 4294901760
        %511 = vmatpush1.msra.mxu0 %v510
        %512 = vmatprep.subr.mxu0 0.0
        %v513 = vand.u32 %v215, 4294901760
        %514 = vmatpush1.msra.mxu0 %v513
        %515 = vmatprep.subr.mxu0 0.0
        %v516 = vand.u32 %v216, 4294901760
        %517 = vmatpush1.msra.mxu0 %v516
        %518 = vmatprep.subr.mxu0 0.0
        %v519 = vand.u32 %v217, 4294901760
        %520 = vmatpush1.msra.mxu0 %v519
        %521 = vmatprep.subr.mxu0 0.0
        %v522 = vand.u32 %v218, 4294901760
        %523 = vmatpush1.msra.mxu0 %v522
        %524 = vmatprep.subr.mxu0 0.0
        %v525 = vand.u32 %v219, 4294901760
        %526 = vmatpush1.msra.mxu0 %v525
        %527 = vmatprep.subr.mxu0 0.0
        %v528 = vand.u32 %v220, 4294901760
        %529 = vmatpush1.msra.mxu0 %v528
        %530 = vmatprep.subr.mxu0 0.0
        %v531 = vand.u32 %v221, 4294901760
        %532 = vmatpush1.msra.mxu0 %v531
        %533 = vmatprep.subr.mxu0 0.0
        %534 = vmatpush1.msra.mxu0 0.0
        %535 = vmatprep.subr.mxu0 0.0
        %536 = vmatpush1.msra.mxu0 0.0
        %537 = vmatprep.subr.mxu0 0.0
        %538 = vmatpush1.msra.mxu0 0.0
        %539 = vmatprep.subr.mxu0 0.0
        %540 = vmatpush1.msra.mxu0 0.0
        %541 = vmatprep.subr.mxu0 0.0
        %542 = vmatpush1.msra.mxu0 0.0
        %543 = vmatprep.subr.mxu0 0.0
        %544 = vmatpush1.msra.mxu0 0.0
        %545 = vmatprep.subr.mxu0 0.0
        %546 = vmatpush1.msra.mxu0 0.0
        %547 = vmatprep.subr.mxu0 0.0
        %548 = vmatpush1.msra.mxu0 0.0
        %549 = vmatprep.subr.mxu0 0.0
        %550 = vmatpush1.msra.mxu0 0.0
        %551 = vmatprep.subr.mxu0 0.0
        %552 = vmatpush1.msra.mxu0 0.0
        %553 = vmatprep.subr.mxu0 0.0
        %554 = vmatpush1.msra.mxu0 0.0
        %555 = vmatprep.subr.mxu0 0.0
        %556 = vmatpush1.msra.mxu0 0.0
        %557 = vmatprep.subr.mxu0 0.0
        %558 = vmatpush1.msra.mxu0 0.0
        %559 = vmatprep.subr.mxu0 0.0
        %560 = vmatpush1.msra.mxu0 0.0
        %561 = vmatprep.subr.mxu0 0.0
        %562 = vmatpush1.msra.mxu0 0.0
        %563 = vmatprep.subr.mxu0 0.0
        %564 = vmatpush1.msra.mxu0 0.0
        %565 = vmatprep.subr.mxu0 0.0
        %566 = vmatpush1.msra.mxu0 0.0
        %567 = vmatprep.subr.mxu0 0.0
        %568 = vmatpush1.msra.mxu0 0.0
        %569 = vmatprep.subr.mxu0 0.0
        %570 = vmatpush1.msra.mxu0 0.0
        %571 = vmatprep.subr.mxu0 0.0
        %572 = vmatpush1.msra.mxu0 0.0
        %573 = vmatprep.subr.mxu0 0.0
        %574 = vmatpush1.msra.mxu0 0.0
        %575 = vmatprep.subr.mxu0 0.0
        %576 = vmatpush1.msra.mxu0 0.0
        %577 = vmatprep.subr.mxu0 0.0
        %578 = vmatpush1.msra.mxu0 0.0
        %579 = vmatprep.subr.mxu0 0.0
        %580 = vmatpush1.msra.mxu0 0.0
        %581 = vmatprep.mubr.f32.mxu0 0.0
        %v582 = vand.u32 %v225, 4294901760
        %v583 = vsub.f32 %v225, %v582
        %v584 = vand.u32 %v583, 4294901760
        %585 = vmatmul.mubr.f32.gmra.mrb[0].mxu0 %v584
        %v586 = vpop.f32.mrb[0].mxu0
        %v587 = vadd.f32 %v506, %v586
        %v588 = vpop.f32.mrb[0].mxu0
        %589 = vdwg.mxu0
        %590 = vmatprep.subr.mxu0 0.0
        %v591 = vand.u32 %v214, 4294901760
        %v592 = vsub.f32 %v214, %v591
        %v593 = vand.u32 %v592, 4294901760
        %594 = vmatpush1.msra.mxu0 %v593
        %595 = vmatprep.subr.mxu0 0.0
        %v596 = vand.u32 %v215, 4294901760
        %v597 = vsub.f32 %v215, %v596
        %v598 = vand.u32 %v597, 4294901760
        %599 = vmatpush1.msra.mxu0 %v598
        %600 = vmatprep.subr.mxu0 0.0
        %v601 = vand.u32 %v216, 4294901760
        %v602 = vsub.f32 %v216, %v601
        %v603 = vand.u32 %v602, 4294901760
        %604 = vmatpush1.msra.mxu0 %v603
        %605 = vmatprep.subr.mxu0 0.0
        %v606 = vand.u32 %v217, 4294901760
        %v607 = vsub.f32 %v217, %v606
        %v608 = vand.u32 %v607, 4294901760
        %609 = vmatpush1.msra.mxu0 %v608
        %610 = vmatprep.subr.mxu0 0.0
        %v611 = vand.u32 %v218, 4294901760
        %v612 = vsub.f32 %v218, %v611
        %v613 = vand.u32 %v612, 4294901760
        %614 = vmatpush1.msra.mxu0 %v613
        %615 = vmatprep.subr.mxu0 0.0
        %v616 = vand.u32 %v219, 4294901760
        %v617 = vsub.f32 %v219, %v616
        %v618 = vand.u32 %v617, 4294901760
        %619 = vmatpush1.msra.mxu0 %v618
        %620 = vmatprep.subr.mxu0 0.0
        %v621 = vand.u32 %v220, 4294901760
        %v622 = vsub.f32 %v220, %v621
        %v623 = vand.u32 %v622, 4294901760
        %624 = vmatpush1.msra.mxu0 %v623
        %625 = vmatprep.subr.mxu0 0.0
        %v626 = vand.u32 %v221, 4294901760
        %v627 = vsub.f32 %v221, %v626
        %v628 = vand.u32 %v627, 4294901760
        %629 = vmatpush1.msra.mxu0 %v628
        %630 = vmatprep.subr.mxu0 0.0
        %631 = vmatpush1.msra.mxu0 0.0
        %632 = vmatprep.subr.mxu0 0.0
        %633 = vmatpush1.msra.mxu0 0.0
        %634 = vmatprep.subr.mxu0 0.0
        %635 = vmatpush1.msra.mxu0 0.0
        %636 = vmatprep.subr.mxu0 0.0
        %637 = vmatpush1.msra.mxu0 0.0
        %638 = vmatprep.subr.mxu0 0.0
        %639 = vmatpush1.msra.mxu0 0.0
        %640 = vmatprep.subr.mxu0 0.0
        %641 = vmatpush1.msra.mxu0 0.0
        %642 = vmatprep.subr.mxu0 0.0
        %643 = vmatpush1.msra.mxu0 0.0
        %644 = vmatprep.subr.mxu0 0.0
        %645 = vmatpush1.msra.mxu0 0.0
        %646 = vmatprep.subr.mxu0 0.0
        %647 = vmatpush1.msra.mxu0 0.0
        %648 = vmatprep.subr.mxu0 0.0
        %649 = vmatpush1.msra.mxu0 0.0
        %650 = vmatprep.subr.mxu0 0.0
        %651 = vmatpush1.msra.mxu0 0.0
        %652 = vmatprep.subr.mxu0 0.0
        %653 = vmatpush1.msra.mxu0 0.0
        %654 = vmatprep.subr.mxu0 0.0
        %655 = vmatpush1.msra.mxu0 0.0
        %656 = vmatprep.subr.mxu0 0.0
        %657 = vmatpush1.msra.mxu0 0.0
        %658 = vmatprep.subr.mxu0 0.0
        %659 = vmatpush1.msra.mxu0 0.0
        %660 = vmatprep.subr.mxu0 0.0
        %661 = vmatpush1.msra.mxu0 0.0
        %662 = vmatprep.subr.mxu0 0.0
        %663 = vmatpush1.msra.mxu0 0.0
        %664 = vmatprep.subr.mxu0 0.0
        %665 = vmatpush1.msra.mxu0 0.0
        %666 = vmatprep.subr.mxu0 0.0
        %667 = vmatpush1.msra.mxu0 0.0
        %668 = vmatprep.subr.mxu0 0.0
        %669 = vmatpush1.msra.mxu0 0.0
        %670 = vmatprep.subr.mxu0 0.0
        %671 = vmatpush1.msra.mxu0 0.0
        %672 = vmatprep.subr.mxu0 0.0
        %673 = vmatpush1.msra.mxu0 0.0
        %674 = vmatprep.subr.mxu0 0.0
        %675 = vmatpush1.msra.mxu0 0.0
        %676 = vmatprep.subr.mxu0 0.0
        %677 = vmatpush1.msra.mxu0 0.0
        %678 = vmatprep.mubr.f32.mxu0 0.0
        %v679 = vand.u32 %v225, 4294901760
        %680 = vmatmul.mubr.f32.gmra.mrb[0].mxu0 %v679
        %v681 = vpop.f32.mrb[0].mxu0
        %v682 = vadd.f32 %v587, %v681
        %v683 = vpop.f32.mrb[0].mxu0
        %684 = vdwg.mxu0
        %685 = vmatprep.subr.mxu0 0.0
        %v686 = vand.u32 %v214, 4294901760
        %687 = vmatpush1.msra.mxu0 %v686
        %688 = vmatprep.subr.mxu0 0.0
        %v689 = vand.u32 %v215, 4294901760
        %690 = vmatpush1.msra.mxu0 %v689
        %691 = vmatprep.subr.mxu0 0.0
        %v692 = vand.u32 %v216, 4294901760
        %693 = vmatpush1.msra.mxu0 %v692
        %694 = vmatprep.subr.mxu0 0.0
        %v695 = vand.u32 %v217, 4294901760
        %696 = vmatpush1.msra.mxu0 %v695
        %697 = vmatprep.subr.mxu0 0.0
        %v698 = vand.u32 %v218, 4294901760
        %699 = vmatpush1.msra.mxu0 %v698
        %700 = vmatprep.subr.mxu0 0.0
        %v701 = vand.u32 %v219, 4294901760
        %702 = vmatpush1.msra.mxu0 %v701
        %703 = vmatprep.subr.mxu0 0.0
        %v704 = vand.u32 %v220, 4294901760
        %705 = vmatpush1.msra.mxu0 %v704
        %706 = vmatprep.subr.mxu0 0.0
        %v707 = vand.u32 %v221, 4294901760
        %708 = vmatpush1.msra.mxu0 %v707
        %709 = vmatprep.subr.mxu0 0.0
        %710 = vmatpush1.msra.mxu0 0.0
        %711 = vmatprep.subr.mxu0 0.0
        %712 = vmatpush1.msra.mxu0 0.0
        %713 = vmatprep.subr.mxu0 0.0
        %714 = vmatpush1.msra.mxu0 0.0
        %715 = vmatprep.subr.mxu0 0.0
        %716 = vmatpush1.msra.mxu0 0.0
        %717 = vmatprep.subr.mxu0 0.0
        %718 = vmatpush1.msra.mxu0 0.0
        %719 = vmatprep.subr.mxu0 0.0
        %720 = vmatpush1.msra.mxu0 0.0
        %721 = vmatprep.subr.mxu0 0.0
        %722 = vmatpush1.msra.mxu0 0.0
        %723 = vmatprep.subr.mxu0 0.0
        %724 = vmatpush1.msra.mxu0 0.0
        %725 = vmatprep.subr.mxu0 0.0
        %726 = vmatpush1.msra.mxu0 0.0
        %727 = vmatprep.subr.mxu0 0.0
        %728 = vmatpush1.msra.mxu0 0.0
        %729 = vmatprep.subr.mxu0 0.0
        %730 = vmatpush1.msra.mxu0 0.0
        %731 = vmatprep.subr.mxu0 0.0
        %732 = vmatpush1.msra.mxu0 0.0
        %733 = vmatprep.subr.mxu0 0.0
        %734 = vmatpush1.msra.mxu0 0.0
        %735 = vmatprep.subr.mxu0 0.0
        %736 = vmatpush1.msra.mxu0 0.0
        %737 = vmatprep.subr.mxu0 0.0
        %738 = vmatpush1.msra.mxu0 0.0
        %739 = vmatprep.subr.mxu0 0.0
        %740 = vmatpush1.msra.mxu0 0.0
        %741 = vmatprep.subr.mxu0 0.0
        %742 = vmatpush1.msra.mxu0 0.0
        %743 = vmatprep.subr.mxu0 0.0
        %744 = vmatpush1.msra.mxu0 0.0
        %745 = vmatprep.subr.mxu0 0.0
        %746 = vmatpush1.msra.mxu0 0.0
        %747 = vmatprep.subr.mxu0 0.0
        %748 = vmatpush1.msra.mxu0 0.0
        %749 = vmatprep.subr.mxu0 0.0
        %750 = vmatpush1.msra.mxu0 0.0
        %751 = vmatprep.subr.mxu0 0.0
        %752 = vmatpush1.msra.mxu0 0.0
        %753 = vmatprep.subr.mxu0 0.0
        %754 = vmatpush1.msra.mxu0 0.0
        %755 = vmatprep.subr.mxu0 0.0
        %756 = vmatpush1.msra.mxu0 0.0
        %757 = vmatprep.mubr.f32.mxu0 0.0
        %v758 = vand.u32 %v225, 4294901760
        %759 = vmatmul.mubr.f32.gmra.mrb[0].mxu0 %v758
        %v760 = vpop.f32.mrb[0].mxu0
        %v761 = vadd.f32 %v682, %v760
        %v762 = vpop.f32.mrb[0].mxu0
        %763 = vdwg.mxu0
        %vm764 = vcmask 261120
        %765 = vst.msk [vmem:[%s193] sm:$0xff] %vm764, %v761
        %766 = vset.pattern.permute.xlu0 1
        %767 = vperm.xlu0 %766, %v205
        %v768 = vpop.permute.xlu0 %767
        %vm769 = vcmp.eq.s32.totalorder %v207, %v768
        %v770 = vsel %vm769, 1, 0
        %v771 = vcvt.s32.f32 %v770
        %v772 = vld [vmem:[%s1] sm:$0xff]
        %v773 = vld [vmem:[%s1 + $0x8] sm:$0xff]
        %v774 = vld [vmem:[%s1 + $0x10] sm:$0xff]
        %v775 = vld [vmem:[%s1 + $0x18] sm:$0xff]
        %v776 = vld [vmem:[%s1 + $0x20] sm:$0xff]
        %v777 = vld [vmem:[%s1 + $0x28] sm:$0xff]
        %v778 = vld [vmem:[%s1 + $0x30] sm:$0xff]
        %v779 = vld [vmem:[%s1 + $0x38] sm:$0xff]
        %v780 = vld [vmem:[%s203] sm:$0xff]
        %782 = vrot.lane.b32.xlu0 %v780, 96
        %v783 = vpop.permute.xlu0 %782
        %v786 = vsel %vm223, %v771, 0
        %788 = vmatprep.subr.mxu0 0.0
        %v789 = vand.u32 %v772, 4294901760
        %790 = vmatpush1.msra.mxu0 %v789
        %791 = vmatprep.subr.mxu0 0.0
        %v792 = vand.u32 %v773, 4294901760
        %793 = vmatpush1.msra.mxu0 %v792
        %794 = vmatprep.subr.mxu0 0.0
        %v795 = vand.u32 %v774, 4294901760
        %796 = vmatpush1.msra.mxu0 %v795
        %797 = vmatprep.subr.mxu0 0.0
        %v798 = vand.u32 %v775, 4294901760
        %799 = vmatpush1.msra.mxu0 %v798
        %800 = vmatprep.subr.mxu0 0.0
        %v801 = vand.u32 %v776, 4294901760
        %802 = vmatpush1.msra.mxu0 %v801
        %803 = vmatprep.subr.mxu0 0.0
        %v804 = vand.u32 %v777, 4294901760
        %805 = vmatpush1.msra.mxu0 %v804
        %806 = vmatprep.subr.mxu0 0.0
        %v807 = vand.u32 %v778, 4294901760
        %808 = vmatpush1.msra.mxu0 %v807
        %809 = vmatprep.subr.mxu0 0.0
        %v810 = vand.u32 %v779, 4294901760
        %811 = vmatpush1.msra.mxu0 %v810
        %812 = vmatprep.subr.mxu0 0.0
        %813 = vmatpush1.msra.mxu0 0.0
        %814 = vmatprep.subr.mxu0 0.0
        %815 = vmatpush1.msra.mxu0 0.0
        %816 = vmatprep.subr.mxu0 0.0
        %817 = vmatpush1.msra.mxu0 0.0
        %818 = vmatprep.subr.mxu0 0.0
        %819 = vmatpush1.msra.mxu0 0.0
        %820 = vmatprep.subr.mxu0 0.0
        %821 = vmatpush1.msra.mxu0 0.0
        %822 = vmatprep.subr.mxu0 0.0
        %823 = vmatpush1.msra.mxu0 0.0
        %824 = vmatprep.subr.mxu0 0.0
        %825 = vmatpush1.msra.mxu0 0.0
        %826 = vmatprep.subr.mxu0 0.0
        %827 = vmatpush1.msra.mxu0 0.0
        %828 = vmatprep.subr.mxu0 0.0
        %829 = vmatpush1.msra.mxu0 0.0
        %830 = vmatprep.subr.mxu0 0.0
        %831 = vmatpush1.msra.mxu0 0.0
        %832 = vmatprep.subr.mxu0 0.0
        %833 = vmatpush1.msra.mxu0 0.0
        %834 = vmatprep.subr.mxu0 0.0
        %835 = vmatpush1.msra.mxu0 0.0
        %836 = vmatprep.subr.mxu0 0.0
        %837 = vmatpush1.msra.mxu0 0.0
        %838 = vmatprep.subr.mxu0 0.0
        %839 = vmatpush1.msra.mxu0 0.0
        %840 = vmatprep.subr.mxu0 0.0
        %841 = vmatpush1.msra.mxu0 0.0
        %842 = vmatprep.subr.mxu0 0.0
        %843 = vmatpush1.msra.mxu0 0.0
        %844 = vmatprep.subr.mxu0 0.0
        %845 = vmatpush1.msra.mxu0 0.0
        %846 = vmatprep.subr.mxu0 0.0
        %847 = vmatpush1.msra.mxu0 0.0
        %848 = vmatprep.subr.mxu0 0.0
        %849 = vmatpush1.msra.mxu0 0.0
        %850 = vmatprep.subr.mxu0 0.0
        %851 = vmatpush1.msra.mxu0 0.0
        %852 = vmatprep.subr.mxu0 0.0
        %853 = vmatpush1.msra.mxu0 0.0
        %854 = vmatprep.subr.mxu0 0.0
        %855 = vmatpush1.msra.mxu0 0.0
        %856 = vmatprep.subr.mxu0 0.0
        %857 = vmatpush1.msra.mxu0 0.0
        %858 = vmatprep.subr.mxu0 0.0
        %859 = vmatpush1.msra.mxu0 0.0
        %860 = vmatprep.mubr.f32.mxu0 0.0
        %v861 = vand.u32 %v786, 4294901760
        %v862 = vsub.f32 %v786, %v861
        %v863 = vand.u32 %v862, 4294901760
        %v864 = vsub.f32 %v862, %v863
        %v865 = vand.u32 %v864, 4294901760
        %866 = vmatmul.mubr.f32.gmra.mrb[0].mxu0 %v865
        %v867 = vpop.f32.mrb[0].mxu0
        %v868 = vadd.f32 %v783, %v867
        %v869 = vpop.f32.mrb[0].mxu0
        %870 = vdwg.mxu0
        %871 = vmatprep.subr.mxu0 0.0
        %v872 = vand.u32 %v772, 4294901760
        %v873 = vsub.f32 %v772, %v872
        %v874 = vand.u32 %v873, 4294901760
        %v875 = vsub.f32 %v873, %v874
        %v876 = vand.u32 %v875, 4294901760
        %877 = vmatpush1.msra.mxu0 %v876
        %878 = vmatprep.subr.mxu0 0.0
        %v879 = vand.u32 %v773, 4294901760
        %v880 = vsub.f32 %v773, %v879
        %v881 = vand.u32 %v880, 4294901760
        %v882 = vsub.f32 %v880, %v881
        %v883 = vand.u32 %v882, 4294901760
        %884 = vmatpush1.msra.mxu0 %v883
        %885 = vmatprep.subr.mxu0 0.0
        %v886 = vand.u32 %v774, 4294901760
        %v887 = vsub.f32 %v774, %v886
        %v888 = vand.u32 %v887, 4294901760
        %v889 = vsub.f32 %v887, %v888
        %v890 = vand.u32 %v889, 4294901760
        %891 = vmatpush1.msra.mxu0 %v890
        %892 = vmatprep.subr.mxu0 0.0
        %v893 = vand.u32 %v775, 4294901760
        %v894 = vsub.f32 %v775, %v893
        %v895 = vand.u32 %v894, 4294901760
        %v896 = vsub.f32 %v894, %v895
        %v897 = vand.u32 %v896, 4294901760
        %898 = vmatpush1.msra.mxu0 %v897
        %899 = vmatprep.subr.mxu0 0.0
        %v900 = vand.u32 %v776, 4294901760
        %v901 = vsub.f32 %v776, %v900
        %v902 = vand.u32 %v901, 4294901760
        %v903 = vsub.f32 %v901, %v902
        %v904 = vand.u32 %v903, 4294901760
        %905 = vmatpush1.msra.mxu0 %v904
        %906 = vmatprep.subr.mxu0 0.0
        %v907 = vand.u32 %v777, 4294901760
        %v908 = vsub.f32 %v777, %v907
        %v909 = vand.u32 %v908, 4294901760
        %v910 = vsub.f32 %v908, %v909
        %v911 = vand.u32 %v910, 4294901760
        %912 = vmatpush1.msra.mxu0 %v911
        %913 = vmatprep.subr.mxu0 0.0
        %v914 = vand.u32 %v778, 4294901760
        %v915 = vsub.f32 %v778, %v914
        %v916 = vand.u32 %v915, 4294901760
        %v917 = vsub.f32 %v915, %v916
        %v918 = vand.u32 %v917, 4294901760
        %919 = vmatpush1.msra.mxu0 %v918
        %920 = vmatprep.subr.mxu0 0.0
        %v921 = vand.u32 %v779, 4294901760
        %v922 = vsub.f32 %v779, %v921
        %v923 = vand.u32 %v922, 4294901760
        %v924 = vsub.f32 %v922, %v923
        %v925 = vand.u32 %v924, 4294901760
        %926 = vmatpush1.msra.mxu0 %v925
        %927 = vmatprep.subr.mxu0 0.0
        %928 = vmatpush1.msra.mxu0 0.0
        %929 = vmatprep.subr.mxu0 0.0
        %930 = vmatpush1.msra.mxu0 0.0
        %931 = vmatprep.subr.mxu0 0.0
        %932 = vmatpush1.msra.mxu0 0.0
        %933 = vmatprep.subr.mxu0 0.0
        %934 = vmatpush1.msra.mxu0 0.0
        %935 = vmatprep.subr.mxu0 0.0
        %936 = vmatpush1.msra.mxu0 0.0
        %937 = vmatprep.subr.mxu0 0.0
        %938 = vmatpush1.msra.mxu0 0.0
        %939 = vmatprep.subr.mxu0 0.0
        %940 = vmatpush1.msra.mxu0 0.0
        %941 = vmatprep.subr.mxu0 0.0
        %942 = vmatpush1.msra.mxu0 0.0
        %943 = vmatprep.subr.mxu0 0.0
        %944 = vmatpush1.msra.mxu0 0.0
        %945 = vmatprep.subr.mxu0 0.0
        %946 = vmatpush1.msra.mxu0 0.0
        %947 = vmatprep.subr.mxu0 0.0
        %948 = vmatpush1.msra.mxu0 0.0
        %949 = vmatprep.subr.mxu0 0.0
        %950 = vmatpush1.msra.mxu0 0.0
        %951 = vmatprep.subr.mxu0 0.0
        %952 = vmatpush1.msra.mxu0 0.0
        %953 = vmatprep.subr.mxu0 0.0
        %954 = vmatpush1.msra.mxu0 0.0
        %955 = vmatprep.subr.mxu0 0.0
        %956 = vmatpush1.msra.mxu0 0.0
        %957 = vmatprep.subr.mxu0 0.0
        %958 = vmatpush1.msra.mxu0 0.0
        %959 = vmatprep.subr.mxu0 0.0
        %960 = vmatpush1.msra.mxu0 0.0
        %961 = vmatprep.subr.mxu0 0.0
        %962 = vmatpush1.msra.mxu0 0.0
        %963 = vmatprep.subr.mxu0 0.0
        %964 = vmatpush1.msra.mxu0 0.0
        %965 = vmatprep.subr.mxu0 0.0
        %966 = vmatpush1.msra.mxu0 0.0
        %967 = vmatprep.subr.mxu0 0.0
        %968 = vmatpush1.msra.mxu0 0.0
        %969 = vmatprep.subr.mxu0 0.0
        %970 = vmatpush1.msra.mxu0 0.0
        %971 = vmatprep.subr.mxu0 0.0
        %972 = vmatpush1.msra.mxu0 0.0
        %973 = vmatprep.subr.mxu0 0.0
        %974 = vmatpush1.msra.mxu0 0.0
        %975 = vmatprep.mubr.f32.mxu0 0.0
        %v976 = vand.u32 %v786, 4294901760
        %977 = vmatmul.mubr.f32.gmra.mrb[0].mxu0 %v976
        %v978 = vpop.f32.mrb[0].mxu0
        %v979 = vadd.f32 %v868, %v978
        %v980 = vpop.f32.mrb[0].mxu0
        %981 = vdwg.mxu0
        %982 = vmatprep.subr.mxu0 0.0
        %v983 = vand.u32 %v772, 4294901760
        %v984 = vsub.f32 %v772, %v983
        %985 = vmatpush1.msra.mxu0 %v984
        %986 = vmatprep.subr.mxu0 0.0
        %v987 = vand.u32 %v773, 4294901760
        %v988 = vsub.f32 %v773, %v987
        %989 = vmatpush1.msra.mxu0 %v988
        %990 = vmatprep.subr.mxu0 0.0
        %v991 = vand.u32 %v774, 4294901760
        %v992 = vsub.f32 %v774, %v991
        %993 = vmatpush1.msra.mxu0 %v992
        %994 = vmatprep.subr.mxu0 0.0
        %v995 = vand.u32 %v775, 4294901760
        %v996 = vsub.f32 %v775, %v995
        %997 = vmatpush1.msra.mxu0 %v996
        %998 = vmatprep.subr.mxu0 0.0
        %v999 = vand.u32 %v776, 4294901760
        %v1000 = vsub.f32 %v776, %v999
        %1001 = vmatpush1.msra.mxu0 %v1000
        %1002 = vmatprep.subr.mxu0 0.0
        %v1003 = vand.u32 %v777, 4294901760
        %v1004 = vsub.f32 %v777, %v1003
        %1005 = vmatpush1.msra.mxu0 %v1004
        %1006 = vmatprep.subr.mxu0 0.0
        %v1007 = vand.u32 %v778, 4294901760
        %v1008 = vsub.f32 %v778, %v1007
        %1009 = vmatpush1.msra.mxu0 %v1008
        %1010 = vmatprep.subr.mxu0 0.0
        %v1011 = vand.u32 %v779, 4294901760
        %v1012 = vsub.f32 %v779, %v1011
        %1013 = vmatpush1.msra.mxu0 %v1012
        %1014 = vmatprep.subr.mxu0 0.0
        %1015 = vmatpush1.msra.mxu0 0.0
        %1016 = vmatprep.subr.mxu0 0.0
        %1017 = vmatpush1.msra.mxu0 0.0
        %1018 = vmatprep.subr.mxu0 0.0
        %1019 = vmatpush1.msra.mxu0 0.0
        %1020 = vmatprep.subr.mxu0 0.0
        %1021 = vmatpush1.msra.mxu0 0.0
        %1022 = vmatprep.subr.mxu0 0.0
        %1023 = vmatpush1.msra.mxu0 0.0
        %1024 = vmatprep.subr.mxu0 0.0
        %1025 = vmatpush1.msra.mxu0 0.0
        %1026 = vmatprep.subr.mxu0 0.0
        %1027 = vmatpush1.msra.mxu0 0.0
        %1028 = vmatprep.subr.mxu0 0.0
        %1029 = vmatpush1.msra.mxu0 0.0
        %1030 = vmatprep.subr.mxu0 0.0
        %1031 = vmatpush1.msra.mxu0 0.0
        %1032 = vmatprep.subr.mxu0 0.0
        %1033 = vmatpush1.msra.mxu0 0.0
        %1034 = vmatprep.subr.mxu0 0.0
        %1035 = vmatpush1.msra.mxu0 0.0
        %1036 = vmatprep.subr.mxu0 0.0
        %1037 = vmatpush1.msra.mxu0 0.0
        %1038 = vmatprep.subr.mxu0 0.0
        %1039 = vmatpush1.msra.mxu0 0.0
        %1040 = vmatprep.subr.mxu0 0.0
        %1041 = vmatpush1.msra.mxu0 0.0
        %1042 = vmatprep.subr.mxu0 0.0
        %1043 = vmatpush1.msra.mxu0 0.0
        %1044 = vmatprep.subr.mxu0 0.0
        %1045 = vmatpush1.msra.mxu0 0.0
        %1046 = vmatprep.subr.mxu0 0.0
        %1047 = vmatpush1.msra.mxu0 0.0
        %1048 = vmatprep.subr.mxu0 0.0
        %1049 = vmatpush1.msra.mxu0 0.0
        %1050 = vmatprep.subr.mxu0 0.0
        %1051 = vmatpush1.msra.mxu0 0.0
        %1052 = vmatprep.subr.mxu0 0.0
        %1053 = vmatpush1.msra.mxu0 0.0
        %1054 = vmatprep.subr.mxu0 0.0
        %1055 = vmatpush1.msra.mxu0 0.0
        %1056 = vmatprep.subr.mxu0 0.0
        %1057 = vmatpush1.msra.mxu0 0.0
        %1058 = vmatprep.subr.mxu0 0.0
        %1059 = vmatpush1.msra.mxu0 0.0
        %1060 = vmatprep.subr.mxu0 0.0
        %1061 = vmatpush1.msra.mxu0 0.0
        %1062 = vmatprep.mubr.f32.mxu0 0.0
        %v1063 = vand.u32 %v786, 4294901760
        %v1064 = vsub.f32 %v786, %v1063
        %1065 = vmatmul.mubr.f32.gmra.mrb[0].mxu0 %v1064
        %v1066 = vpop.f32.mrb[0].mxu0
        %v1067 = vadd.f32 %v979, %v1066
        %v1068 = vpop.f32.mrb[0].mxu0
        %1069 = vdwg.mxu0
        %1070 = vmatprep.subr.mxu0 0.0
        %v1071 = vand.u32 %v772, 4294901760
        %1072 = vmatpush1.msra.mxu0 %v1071
        %1073 = vmatprep.subr.mxu0 0.0
        %v1074 = vand.u32 %v773, 4294901760
        %1075 = vmatpush1.msra.mxu0 %v1074
        %1076 = vmatprep.subr.mxu0 0.0
        %v1077 = vand.u32 %v774, 4294901760
        %1078 = vmatpush1.msra.mxu0 %v1077
        %1079 = vmatprep.subr.mxu0 0.0
        %v1080 = vand.u32 %v775, 4294901760
        %1081 = vmatpush1.msra.mxu0 %v1080
        %1082 = vmatprep.subr.mxu0 0.0
        %v1083 = vand.u32 %v776, 4294901760
        %1084 = vmatpush1.msra.mxu0 %v1083
        %1085 = vmatprep.subr.mxu0 0.0
        %v1086 = vand.u32 %v777, 4294901760
        %1087 = vmatpush1.msra.mxu0 %v1086
        %1088 = vmatprep.subr.mxu0 0.0
        %v1089 = vand.u32 %v778, 4294901760
        %1090 = vmatpush1.msra.mxu0 %v1089
        %1091 = vmatprep.subr.mxu0 0.0
        %v1092 = vand.u32 %v779, 4294901760
        %1093 = vmatpush1.msra.mxu0 %v1092
        %1094 = vmatprep.subr.mxu0 0.0
        %1095 = vmatpush1.msra.mxu0 0.0
        %1096 = vmatprep.subr.mxu0 0.0
        %1097 = vmatpush1.msra.mxu0 0.0
        %1098 = vmatprep.subr.mxu0 0.0
        %1099 = vmatpush1.msra.mxu0 0.0
        %1100 = vmatprep.subr.mxu0 0.0
        %1101 = vmatpush1.msra.mxu0 0.0
        %1102 = vmatprep.subr.mxu0 0.0
        %1103 = vmatpush1.msra.mxu0 0.0
        %1104 = vmatprep.subr.mxu0 0.0
        %1105 = vmatpush1.msra.mxu0 0.0
        %1106 = vmatprep.subr.mxu0 0.0
        %1107 = vmatpush1.msra.mxu0 0.0
        %1108 = vmatprep.subr.mxu0 0.0
        %1109 = vmatpush1.msra.mxu0 0.0
        %1110 = vmatprep.subr.mxu0 0.0
        %1111 = vmatpush1.msra.mxu0 0.0
        %1112 = vmatprep.subr.mxu0 0.0
        %1113 = vmatpush1.msra.mxu0 0.0
        %1114 = vmatprep.subr.mxu0 0.0
        %1115 = vmatpush1.msra.mxu0 0.0
        %1116 = vmatprep.subr.mxu0 0.0
        %1117 = vmatpush1.msra.mxu0 0.0
        %1118 = vmatprep.subr.mxu0 0.0
        %1119 = vmatpush1.msra.mxu0 0.0
        %1120 = vmatprep.subr.mxu0 0.0
        %1121 = vmatpush1.msra.mxu0 0.0
        %1122 = vmatprep.subr.mxu0 0.0
        %1123 = vmatpush1.msra.mxu0 0.0
        %1124 = vmatprep.subr.mxu0 0.0
        %1125 = vmatpush1.msra.mxu0 0.0
        %1126 = vmatprep.subr.mxu0 0.0
        %1127 = vmatpush1.msra.mxu0 0.0
        %1128 = vmatprep.subr.mxu0 0.0
        %1129 = vmatpush1.msra.mxu0 0.0
        %1130 = vmatprep.subr.mxu0 0.0
        %1131 = vmatpush1.msra.mxu0 0.0
        %1132 = vmatprep.subr.mxu0 0.0
        %1133 = vmatpush1.msra.mxu0 0.0
        %1134 = vmatprep.subr.mxu0 0.0
        %1135 = vmatpush1.msra.mxu0 0.0
        %1136 = vmatprep.subr.mxu0 0.0
        %1137 = vmatpush1.msra.mxu0 0.0
        %1138 = vmatprep.subr.mxu0 0.0
        %1139 = vmatpush1.msra.mxu0 0.0
        %1140 = vmatprep.subr.mxu0 0.0
        %1141 = vmatpush1.msra.mxu0 0.0
        %1142 = vmatprep.mubr.f32.mxu0 0.0
        %v1143 = vand.u32 %v786, 4294901760
        %v1144 = vsub.f32 %v786, %v1143
        %v1145 = vand.u32 %v1144, 4294901760
        %1146 = vmatmul.mubr.f32.gmra.mrb[0].mxu0 %v1145
        %v1147 = vpop.f32.mrb[0].mxu0
        %v1148 = vadd.f32 %v1067, %v1147
        %v1149 = vpop.f32.mrb[0].mxu0
        %1150 = vdwg.mxu0
        %1151 = vmatprep.subr.mxu0 0.0
        %v1152 = vand.u32 %v772, 4294901760
        %v1153 = vsub.f32 %v772, %v1152
        %v1154 = vand.u32 %v1153, 4294901760
        %1155 = vmatpush1.msra.mxu0 %v1154
        %1156 = vmatprep.subr.mxu0 0.0
        %v1157 = vand.u32 %v773, 4294901760
        %v1158 = vsub.f32 %v773, %v1157
        %v1159 = vand.u32 %v1158, 4294901760
        %1160 = vmatpush1.msra.mxu0 %v1159
        %1161 = vmatprep.subr.mxu0 0.0
        %v1162 = vand.u32 %v774, 4294901760
        %v1163 = vsub.f32 %v774, %v1162
        %v1164 = vand.u32 %v1163, 4294901760
        %1165 = vmatpush1.msra.mxu0 %v1164
        %1166 = vmatprep.subr.mxu0 0.0
        %v1167 = vand.u32 %v775, 4294901760
        %v1168 = vsub.f32 %v775, %v1167
        %v1169 = vand.u32 %v1168, 4294901760
        %1170 = vmatpush1.msra.mxu0 %v1169
        %1171 = vmatprep.subr.mxu0 0.0
        %v1172 = vand.u32 %v776, 4294901760
        %v1173 = vsub.f32 %v776, %v1172
        %v1174 = vand.u32 %v1173, 4294901760
        %1175 = vmatpush1.msra.mxu0 %v1174
        %1176 = vmatprep.subr.mxu0 0.0
        %v1177 = vand.u32 %v777, 4294901760
        %v1178 = vsub.f32 %v777, %v1177
        %v1179 = vand.u32 %v1178, 4294901760
        %1180 = vmatpush1.msra.mxu0 %v1179
        %1181 = vmatprep.subr.mxu0 0.0
        %v1182 = vand.u32 %v778, 4294901760
        %v1183 = vsub.f32 %v778, %v1182
        %v1184 = vand.u32 %v1183, 4294901760
        %1185 = vmatpush1.msra.mxu0 %v1184
        %1186 = vmatprep.subr.mxu0 0.0
        %v1187 = vand.u32 %v779, 4294901760
        %v1188 = vsub.f32 %v779, %v1187
        %v1189 = vand.u32 %v1188, 4294901760
        %1190 = vmatpush1.msra.mxu0 %v1189
        %1191 = vmatprep.subr.mxu0 0.0
        %1192 = vmatpush1.msra.mxu0 0.0
        %1193 = vmatprep.subr.mxu0 0.0
        %1194 = vmatpush1.msra.mxu0 0.0
        %1195 = vmatprep.subr.mxu0 0.0
        %1196 = vmatpush1.msra.mxu0 0.0
        %1197 = vmatprep.subr.mxu0 0.0
        %1198 = vmatpush1.msra.mxu0 0.0
        %1199 = vmatprep.subr.mxu0 0.0
        %1200 = vmatpush1.msra.mxu0 0.0
        %1201 = vmatprep.subr.mxu0 0.0
        %1202 = vmatpush1.msra.mxu0 0.0
        %1203 = vmatprep.subr.mxu0 0.0
        %1204 = vmatpush1.msra.mxu0 0.0
        %1205 = vmatprep.subr.mxu0 0.0
        %1206 = vmatpush1.msra.mxu0 0.0
        %1207 = vmatprep.subr.mxu0 0.0
        %1208 = vmatpush1.msra.mxu0 0.0
        %1209 = vmatprep.subr.mxu0 0.0
        %1210 = vmatpush1.msra.mxu0 0.0
        %1211 = vmatprep.subr.mxu0 0.0
        %1212 = vmatpush1.msra.mxu0 0.0
        %1213 = vmatprep.subr.mxu0 0.0
        %1214 = vmatpush1.msra.mxu0 0.0
        %1215 = vmatprep.subr.mxu0 0.0
        %1216 = vmatpush1.msra.mxu0 0.0
        %1217 = vmatprep.subr.mxu0 0.0
        %1218 = vmatpush1.msra.mxu0 0.0
        %1219 = vmatprep.subr.mxu0 0.0
        %1220 = vmatpush1.msra.mxu0 0.0
        %1221 = vmatprep.subr.mxu0 0.0
        %1222 = vmatpush1.msra.mxu0 0.0
        %1223 = vmatprep.subr.mxu0 0.0
        %1224 = vmatpush1.msra.mxu0 0.0
        %1225 = vmatprep.subr.mxu0 0.0
        %1226 = vmatpush1.msra.mxu0 0.0
        %1227 = vmatprep.subr.mxu0 0.0
        %1228 = vmatpush1.msra.mxu0 0.0
        %1229 = vmatprep.subr.mxu0 0.0
        %1230 = vmatpush1.msra.mxu0 0.0
        %1231 = vmatprep.subr.mxu0 0.0
        %1232 = vmatpush1.msra.mxu0 0.0
        %1233 = vmatprep.subr.mxu0 0.0
        %1234 = vmatpush1.msra.mxu0 0.0
        %1235 = vmatprep.subr.mxu0 0.0
        %1236 = vmatpush1.msra.mxu0 0.0
        %1237 = vmatprep.subr.mxu0 0.0
        %1238 = vmatpush1.msra.mxu0 0.0
        %1239 = vmatprep.mubr.f32.mxu0 0.0
        %v1240 = vand.u32 %v786, 4294901760
        %1241 = vmatmul.mubr.f32.gmra.mrb[0].mxu0 %v1240
        %v1242 = vpop.f32.mrb[0].mxu0
        %v1243 = vadd.f32 %v1148, %v1242
        %v1244 = vpop.f32.mrb[0].mxu0
        %1245 = vdwg.mxu0
        %1246 = vmatprep.subr.mxu0 0.0
        %v1247 = vand.u32 %v772, 4294901760
        %1248 = vmatpush1.msra.mxu0 %v1247
        %1249 = vmatprep.subr.mxu0 0.0
        %v1250 = vand.u32 %v773, 4294901760
        %1251 = vmatpush1.msra.mxu0 %v1250
        %1252 = vmatprep.subr.mxu0 0.0
        %v1253 = vand.u32 %v774, 4294901760
        %1254 = vmatpush1.msra.mxu0 %v1253
        %1255 = vmatprep.subr.mxu0 0.0
        %v1256 = vand.u32 %v775, 4294901760
        %1257 = vmatpush1.msra.mxu0 %v1256
        %1258 = vmatprep.subr.mxu0 0.0
        %v1259 = vand.u32 %v776, 4294901760
        %1260 = vmatpush1.msra.mxu0 %v1259
        %1261 = vmatprep.subr.mxu0 0.0
        %v1262 = vand.u32 %v777, 4294901760
        %1263 = vmatpush1.msra.mxu0 %v1262
        %1264 = vmatprep.subr.mxu0 0.0
        %v1265 = vand.u32 %v778, 4294901760
        %1266 = vmatpush1.msra.mxu0 %v1265
        %1267 = vmatprep.subr.mxu0 0.0
        %v1268 = vand.u32 %v779, 4294901760
        %1269 = vmatpush1.msra.mxu0 %v1268
        %1270 = vmatprep.subr.mxu0 0.0
        %1271 = vmatpush1.msra.mxu0 0.0
        %1272 = vmatprep.subr.mxu0 0.0
        %1273 = vmatpush1.msra.mxu0 0.0
        %1274 = vmatprep.subr.mxu0 0.0
        %1275 = vmatpush1.msra.mxu0 0.0
        %1276 = vmatprep.subr.mxu0 0.0
        %1277 = vmatpush1.msra.mxu0 0.0
        %1278 = vmatprep.subr.mxu0 0.0
        %1279 = vmatpush1.msra.mxu0 0.0
        %1280 = vmatprep.subr.mxu0 0.0
        %1281 = vmatpush1.msra.mxu0 0.0
        %1282 = vmatprep.subr.mxu0 0.0
        %1283 = vmatpush1.msra.mxu0 0.0
        %1284 = vmatprep.subr.mxu0 0.0
        %1285 = vmatpush1.msra.mxu0 0.0
        %1286 = vmatprep.subr.mxu0 0.0
        %1287 = vmatpush1.msra.mxu0 0.0
        %1288 = vmatprep.subr.mxu0 0.0
        %1289 = vmatpush1.msra.mxu0 0.0
        %1290 = vmatprep.subr.mxu0 0.0
        %1291 = vmatpush1.msra.mxu0 0.0
        %1292 = vmatprep.subr.mxu0 0.0
        %1293 = vmatpush1.msra.mxu0 0.0
        %1294 = vmatprep.subr.mxu0 0.0
        %1295 = vmatpush1.msra.mxu0 0.0
        %1296 = vmatprep.subr.mxu0 0.0
        %1297 = vmatpush1.msra.mxu0 0.0
        %1298 = vmatprep.subr.mxu0 0.0
        %1299 = vmatpush1.msra.mxu0 0.0
        %1300 = vmatprep.subr.mxu0 0.0
        %1301 = vmatpush1.msra.mxu0 0.0
        %1302 = vmatprep.subr.mxu0 0.0
        %1303 = vmatpush1.msra.mxu0 0.0
        %1304 = vmatprep.subr.mxu0 0.0
        %1305 = vmatpush1.msra.mxu0 0.0
        %1306 = vmatprep.subr.mxu0 0.0
        %1307 = vmatpush1.msra.mxu0 0.0
        %1308 = vmatprep.subr.mxu0 0.0
        %1309 = vmatpush1.msra.mxu0 0.0
        %1310 = vmatprep.subr.mxu0 0.0
        %1311 = vmatpush1.msra.mxu0 0.0
        %1312 = vmatprep.subr.mxu0 0.0
        %1313 = vmatpush1.msra.mxu0 0.0
        %1314 = vmatprep.subr.mxu0 0.0
        %1315 = vmatpush1.msra.mxu0 0.0
        %1316 = vmatprep.subr.mxu0 0.0
        %1317 = vmatpush1.msra.mxu0 0.0
        %1318 = vmatprep.mubr.f32.mxu0 0.0
        %v1319 = vand.u32 %v786, 4294901760
        %1320 = vmatmul.mubr.f32.gmra.mrb[0].mxu0 %v1319
        %v1321 = vpop.f32.mrb[0].mxu0
        %v1322 = vadd.f32 %v1243, %v1321
        %v1323 = vpop.f32.mrb[0].mxu0
        %1324 = vdwg.mxu0
        %1326 = vrot.lane.b32.xlu0 %v1322, 32
        %v1327 = vpop.permute.xlu0 %1326
        %vm1329 = vcmask 523520
        %1330 = vst.msk [vmem:[%s193] sm:$0xff] %vm1329, %v1327
        %1331 = vset.pattern.permute.xlu0 2
        %1332 = vperm.xlu0 %1331, %v205
        %v1333 = vpop.permute.xlu0 %1332
        %vm1334 = vcmp.eq.s32.totalorder %v207, %v1333
        %v1335 = vsel %vm1334, 1, 0
        %v1336 = vcvt.s32.f32 %v1335
        %v1337 = vld [vmem:[%s1] sm:$0xff]
        %v1338 = vld [vmem:[%s1 + $0x8] sm:$0xff]
        %v1339 = vld [vmem:[%s1 + $0x10] sm:$0xff]
        %v1340 = vld [vmem:[%s1 + $0x18] sm:$0xff]
        %v1341 = vld [vmem:[%s1 + $0x20] sm:$0xff]
        %v1342 = vld [vmem:[%s1 + $0x28] sm:$0xff]
        %v1343 = vld [vmem:[%s1 + $0x30] sm:$0xff]
        %v1344 = vld [vmem:[%s1 + $0x38] sm:$0xff]
        %v1345 = vld [vmem:[%s203] sm:$0xff]
        %1347 = vrot.lane.b32.xlu0 %v1345, 64
        %v1348 = vpop.permute.xlu0 %1347
        %v1351 = vsel %vm223, %v1336, 0
        %1353 = vmatprep.subr.mxu0 0.0
        %v1354 = vand.u32 %v1337, 4294901760
        %1355 = vmatpush1.msra.mxu0 %v1354
        %1356 = vmatprep.subr.mxu0 0.0
        %v1357 = vand.u32 %v1338, 4294901760
        %1358 = vmatpush1.msra.mxu0 %v1357
        %1359 = vmatprep.subr.mxu0 0.0
        %v1360 = vand.u32 %v1339, 4294901760
        %1361 = vmatpush1.msra.mxu0 %v1360
        %1362 = vmatprep.subr.mxu0 0.0
        %v1363 = vand.u32 %v1340, 4294901760
        %1364 = vmatpush1.msra.mxu0 %v1363
        %1365 = vmatprep.subr.mxu0 0.0
        %v1366 = vand.u32 %v1341, 4294901760
        %1367 = vmatpush1.msra.mxu0 %v1366
        %1368 = vmatprep.subr.mxu0 0.0
        %v1369 = vand.u32 %v1342, 4294901760
        %1370 = vmatpush1.msra.mxu0 %v1369
        %1371 = vmatprep.subr.mxu0 0.0
        %v1372 = vand.u32 %v1343, 4294901760
        %1373 = vmatpush1.msra.mxu0 %v1372
        %1374 = vmatprep.subr.mxu0 0.0
        %v1375 = vand.u32 %v1344, 4294901760
        %1376 = vmatpush1.msra.mxu0 %v1375
        %1377 = vmatprep.subr.mxu0 0.0
        %1378 = vmatpush1.msra.mxu0 0.0
        %1379 = vmatprep.subr.mxu0 0.0
        %1380 = vmatpush1.msra.mxu0 0.0
        %1381 = vmatprep.subr.mxu0 0.0
        %1382 = vmatpush1.msra.mxu0 0.0
        %1383 = vmatprep.subr.mxu0 0.0
        %1384 = vmatpush1.msra.mxu0 0.0
        %1385 = vmatprep.subr.mxu0 0.0
        %1386 = vmatpush1.msra.mxu0 0.0
        %1387 = vmatprep.subr.mxu0 0.0
        %1388 = vmatpush1.msra.mxu0 0.0
        %1389 = vmatprep.subr.mxu0 0.0
        %1390 = vmatpush1.msra.mxu0 0.0
        %1391 = vmatprep.subr.mxu0 0.0
        %1392 = vmatpush1.msra.mxu0 0.0
        %1393 = vmatprep.subr.mxu0 0.0
        %1394 = vmatpush1.msra.mxu0 0.0
        %1395 = vmatprep.subr.mxu0 0.0
        %1396 = vmatpush1.msra.mxu0 0.0
        %1397 = vmatprep.subr.mxu0 0.0
        %1398 = vmatpush1.msra.mxu0 0.0
        %1399 = vmatprep.subr.mxu0 0.0
        %1400 = vmatpush1.msra.mxu0 0.0
        %1401 = vmatprep.subr.mxu0 0.0
        %1402 = vmatpush1.msra.mxu0 0.0
        %1403 = vmatprep.subr.mxu0 0.0
        %1404 = vmatpush1.msra.mxu0 0.0
        %1405 = vmatprep.subr.mxu0 0.0
        %1406 = vmatpush1.msra.mxu0 0.0
        %1407 = vmatprep.subr.mxu0 0.0
        %1408 = vmatpush1.msra.mxu0 0.0
        %1409 = vmatprep.subr.mxu0 0.0
        %1410 = vmatpush1.msra.mxu0 0.0
        %1411 = vmatprep.subr.mxu0 0.0
        %1412 = vmatpush1.msra.mxu0 0.0
        %1413 = vmatprep.subr.mxu0 0.0
        %1414 = vmatpush1.msra.mxu0 0.0
        %1415 = vmatprep.subr.mxu0 0.0
        %1416 = vmatpush1.msra.mxu0 0.0
        %1417 = vmatprep.subr.mxu0 0.0
        %1418 = vmatpush1.msra.mxu0 0.0
        %1419 = vmatprep.subr.mxu0 0.0
        %1420 = vmatpush1.msra.mxu0 0.0
        %1421 = vmatprep.subr.mxu0 0.0
        %1422 = vmatpush1.msra.mxu0 0.0
        %1423 = vmatprep.subr.mxu0 0.0
        %1424 = vmatpush1.msra.mxu0 0.0
        %1425 = vmatprep.mubr.f32.mxu0 0.0
        %v1426 = vand.u32 %v1351, 4294901760
        %v1427 = vsub.f32 %v1351, %v1426
        %v1428 = vand.u32 %v1427, 4294901760
        %v1429 = vsub.f32 %v1427, %v1428
        %v1430 = vand.u32 %v1429, 4294901760
        %1431 = vmatmul.mubr.f32.gmra.mrb[0].mxu0 %v1430
        %v1432 = vpop.f32.mrb[0].mxu0
        %v1433 = vadd.f32 %v1348, %v1432
        %v1434 = vpop.f32.mrb[0].mxu0
        %1435 = vdwg.mxu0
        %1436 = vmatprep.subr.mxu0 0.0
        %v1437 = vand.u32 %v1337, 4294901760
        %v1438 = vsub.f32 %v1337, %v1437
        %v1439 = vand.u32 %v1438, 4294901760
        %v1440 = vsub.f32 %v1438, %v1439
        %v1441 = vand.u32 %v1440, 4294901760
        %1442 = vmatpush1.msra.mxu0 %v1441
        %1443 = vmatprep.subr.mxu0 0.0
        %v1444 = vand.u32 %v1338, 4294901760
        %v1445 = vsub.f32 %v1338, %v1444
        %v1446 = vand.u32 %v1445, 4294901760
        %v1447 = vsub.f32 %v1445, %v1446
        %v1448 = vand.u32 %v1447, 4294901760
        %1449 = vmatpush1.msra.mxu0 %v1448
        %1450 = vmatprep.subr.mxu0 0.0
        %v1451 = vand.u32 %v1339, 4294901760
        %v1452 = vsub.f32 %v1339, %v1451
        %v1453 = vand.u32 %v1452, 4294901760
        %v1454 = vsub.f32 %v1452, %v1453
        %v1455 = vand.u32 %v1454, 4294901760
        %1456 = vmatpush1.msra.mxu0 %v1455
        %1457 = vmatprep.subr.mxu0 0.0
        %v1458 = vand.u32 %v1340, 4294901760
        %v1459 = vsub.f32 %v1340, %v1458
        %v1460 = vand.u32 %v1459, 4294901760
        %v1461 = vsub.f32 %v1459, %v1460
        %v1462 = vand.u32 %v1461, 4294901760
        %1463 = vmatpush1.msra.mxu0 %v1462
        %1464 = vmatprep.subr.mxu0 0.0
        %v1465 = vand.u32 %v1341, 4294901760
        %v1466 = vsub.f32 %v1341, %v1465
        %v1467 = vand.u32 %v1466, 4294901760
        %v1468 = vsub.f32 %v1466, %v1467
        %v1469 = vand.u32 %v1468, 4294901760
        %1470 = vmatpush1.msra.mxu0 %v1469
        %1471 = vmatprep.subr.mxu0 0.0
        %v1472 = vand.u32 %v1342, 4294901760
        %v1473 = vsub.f32 %v1342, %v1472
        %v1474 = vand.u32 %v1473, 4294901760
        %v1475 = vsub.f32 %v1473, %v1474
        %v1476 = vand.u32 %v1475, 4294901760
        %1477 = vmatpush1.msra.mxu0 %v1476
        %1478 = vmatprep.subr.mxu0 0.0
        %v1479 = vand.u32 %v1343, 4294901760
        %v1480 = vsub.f32 %v1343, %v1479
        %v1481 = vand.u32 %v1480, 4294901760
        %v1482 = vsub.f32 %v1480, %v1481
        %v1483 = vand.u32 %v1482, 4294901760
        %1484 = vmatpush1.msra.mxu0 %v1483
        %1485 = vmatprep.subr.mxu0 0.0
        %v1486 = vand.u32 %v1344, 4294901760
        %v1487 = vsub.f32 %v1344, %v1486
        %v1488 = vand.u32 %v1487, 4294901760
        %v1489 = vsub.f32 %v1487, %v1488
        %v1490 = vand.u32 %v1489, 4294901760
        %1491 = vmatpush1.msra.mxu0 %v1490
        %1492 = vmatprep.subr.mxu0 0.0
        %1493 = vmatpush1.msra.mxu0 0.0
        %1494 = vmatprep.subr.mxu0 0.0
        %1495 = vmatpush1.msra.mxu0 0.0
        %1496 = vmatprep.subr.mxu0 0.0
        %1497 = vmatpush1.msra.mxu0 0.0
        %1498 = vmatprep.subr.mxu0 0.0
        %1499 = vmatpush1.msra.mxu0 0.0
        %1500 = vmatprep.subr.mxu0 0.0
        %1501 = vmatpush1.msra.mxu0 0.0
        %1502 = vmatprep.subr.mxu0 0.0
        %1503 = vmatpush1.msra.mxu0 0.0
        %1504 = vmatprep.subr.mxu0 0.0
        %1505 = vmatpush1.msra.mxu0 0.0
        %1506 = vmatprep.subr.mxu0 0.0
        %1507 = vmatpush1.msra.mxu0 0.0
        %1508 = vmatprep.subr.mxu0 0.0
        %1509 = vmatpush1.msra.mxu0 0.0
        %1510 = vmatprep.subr.mxu0 0.0
        %1511 = vmatpush1.msra.mxu0 0.0
        %1512 = vmatprep.subr.mxu0 0.0
        %1513 = vmatpush1.msra.mxu0 0.0
        %1514 = vmatprep.subr.mxu0 0.0
        %1515 = vmatpush1.msra.mxu0 0.0
        %1516 = vmatprep.subr.mxu0 0.0
        %1517 = vmatpush1.msra.mxu0 0.0
        %1518 = vmatprep.subr.mxu0 0.0
        %1519 = vmatpush1.msra.mxu0 0.0
        %1520 = vmatprep.subr.mxu0 0.0
        %1521 = vmatpush1.msra.mxu0 0.0
        %1522 = vmatprep.subr.mxu0 0.0
        %1523 = vmatpush1.msra.mxu0 0.0
        %1524 = vmatprep.subr.mxu0 0.0
        %1525 = vmatpush1.msra.mxu0 0.0
        %1526 = vmatprep.subr.mxu0 0.0
        %1527 = vmatpush1.msra.mxu0 0.0
        %1528 = vmatprep.subr.mxu0 0.0
        %1529 = vmatpush1.msra.mxu0 0.0
        %1530 = vmatprep.subr.mxu0 0.0
        %1531 = vmatpush1.msra.mxu0 0.0
        %1532 = vmatprep.subr.mxu0 0.0
        %1533 = vmatpush1.msra.mxu0 0.0
        %1534 = vmatprep.subr.mxu0 0.0
        %1535 = vmatpush1.msra.mxu0 0.0
        %1536 = vmatprep.subr.mxu0 0.0
        %1537 = vmatpush1.msra.mxu0 0.0
        %1538 = vmatprep.subr.mxu0 0.0
        %1539 = vmatpush1.msra.mxu0 0.0
        %1540 = vmatprep.mubr.f32.mxu0 0.0
        %v1541 = vand.u32 %v1351, 4294901760
        %1542 = vmatmul.mubr.f32.gmra.mrb[0].mxu0 %v1541
        %v1543 = vpop.f32.mrb[0].mxu0
        %v1544 = vadd.f32 %v1433, %v1543
        %v1545 = vpop.f32.mrb[0].mxu0
        %1546 = vdwg.mxu0
        %1547 = vmatprep.subr.mxu0 0.0
        %v1548 = vand.u32 %v1337, 4294901760
        %v1549 = vsub.f32 %v1337, %v1548
        %1550 = vmatpush1.msra.mxu0 %v1549
        %1551 = vmatprep.subr.mxu0 0.0
        %v1552 = vand.u32 %v1338, 4294901760
        %v1553 = vsub.f32 %v1338, %v1552
        %1554 = vmatpush1.msra.mxu0 %v1553
        %1555 = vmatprep.subr.mxu0 0.0
        %v1556 = vand.u32 %v1339, 4294901760
        %v1557 = vsub.f32 %v1339, %v1556
        %1558 = vmatpush1.msra.mxu0 %v1557
        %1559 = vmatprep.subr.mxu0 0.0
        %v1560 = vand.u32 %v1340, 4294901760
        %v1561 = vsub.f32 %v1340, %v1560
        %1562 = vmatpush1.msra.mxu0 %v1561
        %1563 = vmatprep.subr.mxu0 0.0
        %v1564 = vand.u32 %v1341, 4294901760
        %v1565 = vsub.f32 %v1341, %v1564
        %1566 = vmatpush1.msra.mxu0 %v1565
        %1567 = vmatprep.subr.mxu0 0.0
        %v1568 = vand.u32 %v1342, 4294901760
        %v1569 = vsub.f32 %v1342, %v1568
        %1570 = vmatpush1.msra.mxu0 %v1569
        %1571 = vmatprep.subr.mxu0 0.0
        %v1572 = vand.u32 %v1343, 4294901760
        %v1573 = vsub.f32 %v1343, %v1572
        %1574 = vmatpush1.msra.mxu0 %v1573
        %1575 = vmatprep.subr.mxu0 0.0
        %v1576 = vand.u32 %v1344, 4294901760
        %v1577 = vsub.f32 %v1344, %v1576
        %1578 = vmatpush1.msra.mxu0 %v1577
        %1579 = vmatprep.subr.mxu0 0.0
        %1580 = vmatpush1.msra.mxu0 0.0
        %1581 = vmatprep.subr.mxu0 0.0
        %1582 = vmatpush1.msra.mxu0 0.0
        %1583 = vmatprep.subr.mxu0 0.0
        %1584 = vmatpush1.msra.mxu0 0.0
        %1585 = vmatprep.subr.mxu0 0.0
        %1586 = vmatpush1.msra.mxu0 0.0
        %1587 = vmatprep.subr.mxu0 0.0
        %1588 = vmatpush1.msra.mxu0 0.0
        %1589 = vmatprep.subr.mxu0 0.0
        %1590 = vmatpush1.msra.mxu0 0.0
        %1591 = vmatprep.subr.mxu0 0.0
        %1592 = vmatpush1.msra.mxu0 0.0
        %1593 = vmatprep.subr.mxu0 0.0
        %1594 = vmatpush1.msra.mxu0 0.0
        %1595 = vmatprep.subr.mxu0 0.0
        %1596 = vmatpush1.msra.mxu0 0.0
        %1597 = vmatprep.subr.mxu0 0.0
        %1598 = vmatpush1.msra.mxu0 0.0
        %1599 = vmatprep.subr.mxu0 0.0
        %1600 = vmatpush1.msra.mxu0 0.0
        %1601 = vmatprep.subr.mxu0 0.0
        %1602 = vmatpush1.msra.mxu0 0.0
        %1603 = vmatprep.subr.mxu0 0.0
        %1604 = vmatpush1.msra.mxu0 0.0
        %1605 = vmatprep.subr.mxu0 0.0
        %1606 = vmatpush1.msra.mxu0 0.0
        %1607 = vmatprep.subr.mxu0 0.0
        %1608 = vmatpush1.msra.mxu0 0.0
        %1609 = vmatprep.subr.mxu0 0.0
        %1610 = vmatpush1.msra.mxu0 0.0
        %1611 = vmatprep.subr.mxu0 0.0
        %1612 = vmatpush1.msra.mxu0 0.0
        %1613 = vmatprep.subr.mxu0 0.0
        %1614 = vmatpush1.msra.mxu0 0.0
        %1615 = vmatprep.subr.mxu0 0.0
        %1616 = vmatpush1.msra.mxu0 0.0
        %1617 = vmatprep.subr.mxu0 0.0
        %1618 = vmatpush1.msra.mxu0 0.0
        %1619 = vmatprep.subr.mxu0 0.0
        %1620 = vmatpush1.msra.mxu0 0.0
        %1621 = vmatprep.subr.mxu0 0.0
        %1622 = vmatpush1.msra.mxu0 0.0
        %1623 = vmatprep.subr.mxu0 0.0
        %1624 = vmatpush1.msra.mxu0 0.0
        %1625 = vmatprep.subr.mxu0 0.0
        %1626 = vmatpush1.msra.mxu0 0.0
        %1627 = vmatprep.mubr.f32.mxu0 0.0
        %v1628 = vand.u32 %v1351, 4294901760
        %v1629 = vsub.f32 %v1351, %v1628
        %1630 = vmatmul.mubr.f32.gmra.mrb[0].mxu0 %v1629
        %v1631 = vpop.f32.mrb[0].mxu0
        %v1632 = vadd.f32 %v1544, %v1631
        %v1633 = vpop.f32.mrb[0].mxu0
        %1634 = vdwg.mxu0
        %1635 = vmatprep.subr.mxu0 0.0
        %v1636 = vand.u32 %v1337, 4294901760
        %1637 = vmatpush1.msra.mxu0 %v1636
        %1638 = vmatprep.subr.mxu0 0.0
        %v1639 = vand.u32 %v1338, 4294901760
        %1640 = vmatpush1.msra.mxu0 %v1639
        %1641 = vmatprep.subr.mxu0 0.0
        %v1642 = vand.u32 %v1339, 4294901760
        %1643 = vmatpush1.msra.mxu0 %v1642
        %1644 = vmatprep.subr.mxu0 0.0
        %v1645 = vand.u32 %v1340, 4294901760
        %1646 = vmatpush1.msra.mxu0 %v1645
        %1647 = vmatprep.subr.mxu0 0.0
        %v1648 = vand.u32 %v1341, 4294901760
        %1649 = vmatpush1.msra.mxu0 %v1648
        %1650 = vmatprep.subr.mxu0 0.0
        %v1651 = vand.u32 %v1342, 4294901760
        %1652 = vmatpush1.msra.mxu0 %v1651
        %1653 = vmatprep.subr.mxu0 0.0
        %v1654 = vand.u32 %v1343, 4294901760
        %1655 = vmatpush1.msra.mxu0 %v1654
        %1656 = vmatprep.subr.mxu0 0.0
        %v1657 = vand.u32 %v1344, 4294901760
        %1658 = vmatpush1.msra.mxu0 %v1657
        %1659 = vmatprep.subr.mxu0 0.0
        %1660 = vmatpush1.msra.mxu0 0.0
        %1661 = vmatprep.subr.mxu0 0.0
        %1662 = vmatpush1.msra.mxu0 0.0
        %1663 = vmatprep.subr.mxu0 0.0
        %1664 = vmatpush1.msra.mxu0 0.0
        %1665 = vmatprep.subr.mxu0 0.0
        %1666 = vmatpush1.msra.mxu0 0.0
        %1667 = vmatprep.subr.mxu0 0.0
        %1668 = vmatpush1.msra.mxu0 0.0
        %1669 = vmatprep.subr.mxu0 0.0
        %1670 = vmatpush1.msra.mxu0 0.0
        %1671 = vmatprep.subr.mxu0 0.0
        %1672 = vmatpush1.msra.mxu0 0.0
        %1673 = vmatprep.subr.mxu0 0.0
        %1674 = vmatpush1.msra.mxu0 0.0
        %1675 = vmatprep.subr.mxu0 0.0
        %1676 = vmatpush1.msra.mxu0 0.0
        %1677 = vmatprep.subr.mxu0 0.0
        %1678 = vmatpush1.msra.mxu0 0.0
        %1679 = vmatprep.subr.mxu0 0.0
        %1680 = vmatpush1.msra.mxu0 0.0
        %1681 = vmatprep.subr.mxu0 0.0
        %1682 = vmatpush1.msra.mxu0 0.0
        %1683 = vmatprep.subr.mxu0 0.0
        %1684 = vmatpush1.msra.mxu0 0.0
        %1685 = vmatprep.subr.mxu0 0.0
        %1686 = vmatpush1.msra.mxu0 0.0
        %1687 = vmatprep.subr.mxu0 0.0
        %1688 = vmatpush1.msra.mxu0 0.0
        %1689 = vmatprep.subr.mxu0 0.0
        %1690 = vmatpush1.msra.mxu0 0.0
        %1691 = vmatprep.subr.mxu0 0.0
        %1692 = vmatpush1.msra.mxu0 0.0
        %1693 = vmatprep.subr.mxu0 0.0
        %1694 = vmatpush1.msra.mxu0 0.0
        %1695 = vmatprep.subr.mxu0 0.0
        %1696 = vmatpush1.msra.mxu0 0.0
        %1697 = vmatprep.subr.mxu0 0.0
        %1698 = vmatpush1.msra.mxu0 0.0
        %1699 = vmatprep.subr.mxu0 0.0
        %1700 = vmatpush1.msra.mxu0 0.0
        %1701 = vmatprep.subr.mxu0 0.0
        %1702 = vmatpush1.msra.mxu0 0.0
        %1703 = vmatprep.subr.mxu0 0.0
        %1704 = vmatpush1.msra.mxu0 0.0
        %1705 = vmatprep.subr.mxu0 0.0
        %1706 = vmatpush1.msra.mxu0 0.0
        %1707 = vmatprep.mubr.f32.mxu0 0.0
        %v1708 = vand.u32 %v1351, 4294901760
        %v1709 = vsub.f32 %v1351, %v1708
        %v1710 = vand.u32 %v1709, 4294901760
        %1711 = vmatmul.mubr.f32.gmra.mrb[0].mxu0 %v1710
        %v1712 = vpop.f32.mrb[0].mxu0
        %v1713 = vadd.f32 %v1632, %v1712
        %v1714 = vpop.f32.mrb[0].mxu0
        %1715 = vdwg.mxu0
        %1716 = vmatprep.subr.mxu0 0.0
        %v1717 = vand.u32 %v1337, 4294901760
        %v1718 = vsub.f32 %v1337, %v1717
        %v1719 = vand.u32 %v1718, 4294901760
        %1720 = vmatpush1.msra.mxu0 %v1719
        %1721 = vmatprep.subr.mxu0 0.0
        %v1722 = vand.u32 %v1338, 4294901760
        %v1723 = vsub.f32 %v1338, %v1722
        %v1724 = vand.u32 %v1723, 4294901760
        %1725 = vmatpush1.msra.mxu0 %v1724
        %1726 = vmatprep.subr.mxu0 0.0
        %v1727 = vand.u32 %v1339, 4294901760
        %v1728 = vsub.f32 %v1339, %v1727
        %v1729 = vand.u32 %v1728, 4294901760
        %1730 = vmatpush1.msra.mxu0 %v1729
        %1731 = vmatprep.subr.mxu0 0.0
        %v1732 = vand.u32 %v1340, 4294901760
        %v1733 = vsub.f32 %v1340, %v1732
        %v1734 = vand.u32 %v1733, 4294901760
        %1735 = vmatpush1.msra.mxu0 %v1734
        %1736 = vmatprep.subr.mxu0 0.0
        %v1737 = vand.u32 %v1341, 4294901760
        %v1738 = vsub.f32 %v1341, %v1737
        %v1739 = vand.u32 %v1738, 4294901760
        %1740 = vmatpush1.msra.mxu0 %v1739
        %1741 = vmatprep.subr.mxu0 0.0
        %v1742 = vand.u32 %v1342, 4294901760
        %v1743 = vsub.f32 %v1342, %v1742
        %v1744 = vand.u32 %v1743, 4294901760
        %1745 = vmatpush1.msra.mxu0 %v1744
        %1746 = vmatprep.subr.mxu0 0.0
        %v1747 = vand.u32 %v1343, 4294901760
        %v1748 = vsub.f32 %v1343, %v1747
        %v1749 = vand.u32 %v1748, 4294901760
        %1750 = vmatpush1.msra.mxu0 %v1749
        %1751 = vmatprep.subr.mxu0 0.0
        %v1752 = vand.u32 %v1344, 4294901760
        %v1753 = vsub.f32 %v1344, %v1752
        %v1754 = vand.u32 %v1753, 4294901760
        %1755 = vmatpush1.msra.mxu0 %v1754
        %1756 = vmatprep.subr.mxu0 0.0
        %1757 = vmatpush1.msra.mxu0 0.0
        %1758 = vmatprep.subr.mxu0 0.0
        %1759 = vmatpush1.msra.mxu0 0.0
        %1760 = vmatprep.subr.mxu0 0.0
        %1761 = vmatpush1.msra.mxu0 0.0
        %1762 = vmatprep.subr.mxu0 0.0
        %1763 = vmatpush1.msra.mxu0 0.0
        %1764 = vmatprep.subr.mxu0 0.0
        %1765 = vmatpush1.msra.mxu0 0.0
        %1766 = vmatprep.subr.mxu0 0.0
        %1767 = vmatpush1.msra.mxu0 0.0
        %1768 = vmatprep.subr.mxu0 0.0
        %1769 = vmatpush1.msra.mxu0 0.0
        %1770 = vmatprep.subr.mxu0 0.0
        %1771 = vmatpush1.msra.mxu0 0.0
        %1772 = vmatprep.subr.mxu0 0.0
        %1773 = vmatpush1.msra.mxu0 0.0
        %1774 = vmatprep.subr.mxu0 0.0
        %1775 = vmatpush1.msra.mxu0 0.0
        %1776 = vmatprep.subr.mxu0 0.0
        %1777 = vmatpush1.msra.mxu0 0.0
        %1778 = vmatprep.subr.mxu0 0.0
        %1779 = vmatpush1.msra.mxu0 0.0
        %1780 = vmatprep.subr.mxu0 0.0
        %1781 = vmatpush1.msra.mxu0 0.0
        %1782 = vmatprep.subr.mxu0 0.0
        %1783 = vmatpush1.msra.mxu0 0.0
        %1784 = vmatprep.subr.mxu0 0.0
        %1785 = vmatpush1.msra.mxu0 0.0
        %1786 = vmatprep.subr.mxu0 0.0
        %1787 = vmatpush1.msra.mxu0 0.0
        %1788 = vmatprep.subr.mxu0 0.0
        %1789 = vmatpush1.msra.mxu0 0.0
        %1790 = vmatprep.subr.mxu0 0.0
        %1791 = vmatpush1.msra.mxu0 0.0
        %1792 = vmatprep.subr.mxu0 0.0
        %1793 = vmatpush1.msra.mxu0 0.0
        %1794 = vmatprep.subr.mxu0 0.0
        %1795 = vmatpush1.msra.mxu0 0.0
        %1796 = vmatprep.subr.mxu0 0.0
        %1797 = vmatpush1.msra.mxu0 0.0
        %1798 = vmatprep.subr.mxu0 0.0
        %1799 = vmatpush1.msra.mxu0 0.0
        %1800 = vmatprep.subr.mxu0 0.0
        %1801 = vmatpush1.msra.mxu0 0.0
        %1802 = vmatprep.subr.mxu0 0.0
        %1803 = vmatpush1.msra.mxu0 0.0
        %1804 = vmatprep.mubr.f32.mxu0 0.0
        %v1805 = vand.u32 %v1351, 4294901760
        %1806 = vmatmul.mubr.f32.gmra.mrb[0].mxu0 %v1805
        %v1807 = vpop.f32.mrb[0].mxu0
        %v1808 = vadd.f32 %v1713, %v1807
        %v1809 = vpop.f32.mrb[0].mxu0
        %1810 = vdwg.mxu0
        %1811 = vmatprep.subr.mxu0 0.0
        %v1812 = vand.u32 %v1337, 4294901760
        %1813 = vmatpush1.msra.mxu0 %v1812
        %1814 = vmatprep.subr.mxu0 0.0
        %v1815 = vand.u32 %v1338, 4294901760
        %1816 = vmatpush1.msra.mxu0 %v1815
        %1817 = vmatprep.subr.mxu0 0.0
        %v1818 = vand.u32 %v1339, 4294901760
        %1819 = vmatpush1.msra.mxu0 %v1818
        %1820 = vmatprep.subr.mxu0 0.0
        %v1821 = vand.u32 %v1340, 4294901760
        %1822 = vmatpush1.msra.mxu0 %v1821
        %1823 = vmatprep.subr.mxu0 0.0
        %v1824 = vand.u32 %v1341, 4294901760
        %1825 = vmatpush1.msra.mxu0 %v1824
        %1826 = vmatprep.subr.mxu0 0.0
        %v1827 = vand.u32 %v1342, 4294901760
        %1828 = vmatpush1.msra.mxu0 %v1827
        %1829 = vmatprep.subr.mxu0 0.0
        %v1830 = vand.u32 %v1343, 4294901760
        %1831 = vmatpush1.msra.mxu0 %v1830
        %1832 = vmatprep.subr.mxu0 0.0
        %v1833 = vand.u32 %v1344, 4294901760
        %1834 = vmatpush1.msra.mxu0 %v1833
        %1835 = vmatprep.subr.mxu0 0.0
        %1836 = vmatpush1.msra.mxu0 0.0
        %1837 = vmatprep.subr.mxu0 0.0
        %1838 = vmatpush1.msra.mxu0 0.0
        %1839 = vmatprep.subr.mxu0 0.0
        %1840 = vmatpush1.msra.mxu0 0.0
        %1841 = vmatprep.subr.mxu0 0.0
        %1842 = vmatpush1.msra.mxu0 0.0
        %1843 = vmatprep.subr.mxu0 0.0
        %1844 = vmatpush1.msra.mxu0 0.0
        %1845 = vmatprep.subr.mxu0 0.0
        %1846 = vmatpush1.msra.mxu0 0.0
        %1847 = vmatprep.subr.mxu0 0.0
        %1848 = vmatpush1.msra.mxu0 0.0
        %1849 = vmatprep.subr.mxu0 0.0
        %1850 = vmatpush1.msra.mxu0 0.0
        %1851 = vmatprep.subr.mxu0 0.0
        %1852 = vmatpush1.msra.mxu0 0.0
        %1853 = vmatprep.subr.mxu0 0.0
        %1854 = vmatpush1.msra.mxu0 0.0
        %1855 = vmatprep.subr.mxu0 0.0
        %1856 = vmatpush1.msra.mxu0 0.0
        %1857 = vmatprep.subr.mxu0 0.0
        %1858 = vmatpush1.msra.mxu0 0.0
        %1859 = vmatprep.subr.mxu0 0.0
        %1860 = vmatpush1.msra.mxu0 0.0
        %1861 = vmatprep.subr.mxu0 0.0
        %1862 = vmatpush1.msra.mxu0 0.0
        %1863 = vmatprep.subr.mxu0 0.0
        %1864 = vmatpush1.msra.mxu0 0.0
        %1865 = vmatprep.subr.mxu0 0.0
        %1866 = vmatpush1.msra.mxu0 0.0
        %1867 = vmatprep.subr.mxu0 0.0
        %1868 = vmatpush1.msra.mxu0 0.0
        %1869 = vmatprep.subr.mxu0 0.0
        %1870 = vmatpush1.msra.mxu0 0.0
        %1871 = vmatprep.subr.mxu0 0.0
        %1872 = vmatpush1.msra.mxu0 0.0
        %1873 = vmatprep.subr.mxu0 0.0
        %1874 = vmatpush1.msra.mxu0 0.0
        %1875 = vmatprep.subr.mxu0 0.0
        %1876 = vmatpush1.msra.mxu0 0.0
        %1877 = vmatprep.subr.mxu0 0.0
        %1878 = vmatpush1.msra.mxu0 0.0
        %1879 = vmatprep.subr.mxu0 0.0
        %1880 = vmatpush1.msra.mxu0 0.0
        %1881 = vmatprep.subr.mxu0 0.0
        %1882 = vmatpush1.msra.mxu0 0.0
        %1883 = vmatprep.mubr.f32.mxu0 0.0
        %v1884 = vand.u32 %v1351, 4294901760
        %1885 = vmatmul.mubr.f32.gmra.mrb[0].mxu0 %v1884
        %v1886 = vpop.f32.mrb[0].mxu0
        %v1887 = vadd.f32 %v1808, %v1886
        %v1888 = vpop.f32.mrb[0].mxu0
        %1889 = vdwg.mxu0
        %1891 = vrot.lane.b32.xlu0 %v1887, 64
        %v1892 = vpop.permute.xlu0 %1891
        %vm1894 = vcmask 785920
        %1895 = vst.msk [vmem:[%s193] sm:$0xff] %vm1894, %v1892
        %1896 = vset.pattern.permute.xlu0 3
        %1897 = vperm.xlu0 %1896, %v205
        %v1898 = vpop.permute.xlu0 %1897
        %vm1899 = vcmp.eq.s32.totalorder %v207, %v1898
        %v1900 = vsel %vm1899, 1, 0
        %v1901 = vcvt.s32.f32 %v1900
        %v1902 = vld [vmem:[%s1] sm:$0xff]
        %v1903 = vld [vmem:[%s1 + $0x8] sm:$0xff]
        %v1904 = vld [vmem:[%s1 + $0x10] sm:$0xff]
        %v1905 = vld [vmem:[%s1 + $0x18] sm:$0xff]
        %v1906 = vld [vmem:[%s1 + $0x20] sm:$0xff]
        %v1907 = vld [vmem:[%s1 + $0x28] sm:$0xff]
        %v1908 = vld [vmem:[%s1 + $0x30] sm:$0xff]
        %v1909 = vld [vmem:[%s1 + $0x38] sm:$0xff]
        %v1910 = vld [vmem:[%s203] sm:$0xff]
        %1912 = vrot.lane.b32.xlu0 %v1910, 32
        %v1913 = vpop.permute.xlu0 %1912
        %v1916 = vsel %vm223, %v1901, 0
        %1918 = vmatprep.subr.mxu0 0.0
        %v1919 = vand.u32 %v1902, 4294901760
        %1920 = vmatpush1.msra.mxu0 %v1919
        %1921 = vmatprep.subr.mxu0 0.0
        %v1922 = vand.u32 %v1903, 4294901760
        %1923 = vmatpush1.msra.mxu0 %v1922
        %1924 = vmatprep.subr.mxu0 0.0
        %v1925 = vand.u32 %v1904, 4294901760
        %1926 = vmatpush1.msra.mxu0 %v1925
        %1927 = vmatprep.subr.mxu0 0.0
        %v1928 = vand.u32 %v1905, 4294901760
        %1929 = vmatpush1.msra.mxu0 %v1928
        %1930 = vmatprep.subr.mxu0 0.0
        %v1931 = vand.u32 %v1906, 4294901760
        %1932 = vmatpush1.msra.mxu0 %v1931
        %1933 = vmatprep.subr.mxu0 0.0
        %v1934 = vand.u32 %v1907, 4294901760
        %1935 = vmatpush1.msra.mxu0 %v1934
        %1936 = vmatprep.subr.mxu0 0.0
        %v1937 = vand.u32 %v1908, 4294901760
        %1938 = vmatpush1.msra.mxu0 %v1937
        %1939 = vmatprep.subr.mxu0 0.0
        %v1940 = vand.u32 %v1909, 4294901760
        %1941 = vmatpush1.msra.mxu0 %v1940
        %1942 = vmatprep.subr.mxu0 0.0
        %1943 = vmatpush1.msra.mxu0 0.0
        %1944 = vmatprep.subr.mxu0 0.0
        %1945 = vmatpush1.msra.mxu0 0.0
        %1946 = vmatprep.subr.mxu0 0.0
        %1947 = vmatpush1.msra.mxu0 0.0
        %1948 = vmatprep.subr.mxu0 0.0
        %1949 = vmatpush1.msra.mxu0 0.0
        %1950 = vmatprep.subr.mxu0 0.0
        %1951 = vmatpush1.msra.mxu0 0.0
        %1952 = vmatprep.subr.mxu0 0.0
        %1953 = vmatpush1.msra.mxu0 0.0
        %1954 = vmatprep.subr.mxu0 0.0
        %1955 = vmatpush1.msra.mxu0 0.0
        %1956 = vmatprep.subr.mxu0 0.0
        %1957 = vmatpush1.msra.mxu0 0.0
        %1958 = vmatprep.subr.mxu0 0.0
        %1959 = vmatpush1.msra.mxu0 0.0
        %1960 = vmatprep.subr.mxu0 0.0
        %1961 = vmatpush1.msra.mxu0 0.0
        %1962 = vmatprep.subr.mxu0 0.0
        %1963 = vmatpush1.msra.mxu0 0.0
        %1964 = vmatprep.subr.mxu0 0.0
        %1965 = vmatpush1.msra.mxu0 0.0
        %1966 = vmatprep.subr.mxu0 0.0
        %1967 = vmatpush1.msra.mxu0 0.0
        %1968 = vmatprep.subr.mxu0 0.0
        %1969 = vmatpush1.msra.mxu0 0.0
        %1970 = vmatprep.subr.mxu0 0.0
        %1971 = vmatpush1.msra.mxu0 0.0
        %1972 = vmatprep.subr.mxu0 0.0
        %1973 = vmatpush1.msra.mxu0 0.0
        %1974 = vmatprep.subr.mxu0 0.0
        %1975 = vmatpush1.msra.mxu0 0.0
        %1976 = vmatprep.subr.mxu0 0.0
        %1977 = vmatpush1.msra.mxu0 0.0
        %1978 = vmatprep.subr.mxu0 0.0
        %1979 = vmatpush1.msra.mxu0 0.0
        %1980 = vmatprep.subr.mxu0 0.0
        %1981 = vmatpush1.msra.mxu0 0.0
        %1982 = vmatprep.subr.mxu0 0.0
        %1983 = vmatpush1.msra.mxu0 0.0
        %1984 = vmatprep.subr.mxu0 0.0
        %1985 = vmatpush1.msra.mxu0 0.0
        %1986 = vmatprep.subr.mxu0 0.0
        %1987 = vmatpush1.msra.mxu0 0.0
        %1988 = vmatprep.subr.mxu0 0.0
        %1989 = vmatpush1.msra.mxu0 0.0
        %1990 = vmatprep.mubr.f32.mxu0 0.0
        %v1991 = vand.u32 %v1916, 4294901760
        %v1992 = vsub.f32 %v1916, %v1991
        %v1993 = vand.u32 %v1992, 4294901760
        %v1994 = vsub.f32 %v1992, %v1993
        %v1995 = vand.u32 %v1994, 4294901760
        %1996 = vmatmul.mubr.f32.gmra.mrb[0].mxu0 %v1995
        %v1997 = vpop.f32.mrb[0].mxu0
        %v1998 = vadd.f32 %v1913, %v1997
        %v1999 = vpop.f32.mrb[0].mxu0
        %2000 = vdwg.mxu0
        %2001 = vmatprep.subr.mxu0 0.0
        %v2002 = vand.u32 %v1902, 4294901760
        %v2003 = vsub.f32 %v1902, %v2002
        %v2004 = vand.u32 %v2003, 4294901760
        %v2005 = vsub.f32 %v2003, %v2004
        %v2006 = vand.u32 %v2005, 4294901760
        %2007 = vmatpush1.msra.mxu0 %v2006
        %2008 = vmatprep.subr.mxu0 0.0
        %v2009 = vand.u32 %v1903, 4294901760
        %v2010 = vsub.f32 %v1903, %v2009
        %v2011 = vand.u32 %v2010, 4294901760
        %v2012 = vsub.f32 %v2010, %v2011
        %v2013 = vand.u32 %v2012, 4294901760
        %2014 = vmatpush1.msra.mxu0 %v2013
        %2015 = vmatprep.subr.mxu0 0.0
        %v2016 = vand.u32 %v1904, 4294901760
        %v2017 = vsub.f32 %v1904, %v2016
        %v2018 = vand.u32 %v2017, 4294901760
        %v2019 = vsub.f32 %v2017, %v2018
        %v2020 = vand.u32 %v2019, 4294901760
        %2021 = vmatpush1.msra.mxu0 %v2020
        %2022 = vmatprep.subr.mxu0 0.0
        %v2023 = vand.u32 %v1905, 4294901760
        %v2024 = vsub.f32 %v1905, %v2023
        %v2025 = vand.u32 %v2024, 4294901760
        %v2026 = vsub.f32 %v2024, %v2025
        %v2027 = vand.u32 %v2026, 4294901760
        %2028 = vmatpush1.msra.mxu0 %v2027
        %2029 = vmatprep.subr.mxu0 0.0
        %v2030 = vand.u32 %v1906, 4294901760
        %v2031 = vsub.f32 %v1906, %v2030
        %v2032 = vand.u32 %v2031, 4294901760
        %v2033 = vsub.f32 %v2031, %v2032
        %v2034 = vand.u32 %v2033, 4294901760
        %2035 = vmatpush1.msra.mxu0 %v2034
        %2036 = vmatprep.subr.mxu0 0.0
        %v2037 = vand.u32 %v1907, 4294901760
        %v2038 = vsub.f32 %v1907, %v2037
        %v2039 = vand.u32 %v2038, 4294901760
        %v2040 = vsub.f32 %v2038, %v2039
        %v2041 = vand.u32 %v2040, 4294901760
        %2042 = vmatpush1.msra.mxu0 %v2041
        %2043 = vmatprep.subr.mxu0 0.0
        %v2044 = vand.u32 %v1908, 4294901760
        %v2045 = vsub.f32 %v1908, %v2044
        %v2046 = vand.u32 %v2045, 4294901760
        %v2047 = vsub.f32 %v2045, %v2046
        %v2048 = vand.u32 %v2047, 4294901760
        %2049 = vmatpush1.msra.mxu0 %v2048
        %2050 = vmatprep.subr.mxu0 0.0
        %v2051 = vand.u32 %v1909, 4294901760
        %v2052 = vsub.f32 %v1909, %v2051
        %v2053 = vand.u32 %v2052, 4294901760
        %v2054 = vsub.f32 %v2052, %v2053
        %v2055 = vand.u32 %v2054, 4294901760
        %2056 = vmatpush1.msra.mxu0 %v2055
        %2057 = vmatprep.subr.mxu0 0.0
        %2058 = vmatpush1.msra.mxu0 0.0
        %2059 = vmatprep.subr.mxu0 0.0
        %2060 = vmatpush1.msra.mxu0 0.0
        %2061 = vmatprep.subr.mxu0 0.0
        %2062 = vmatpush1.msra.mxu0 0.0
        %2063 = vmatprep.subr.mxu0 0.0
        %2064 = vmatpush1.msra.mxu0 0.0
        %2065 = vmatprep.subr.mxu0 0.0
        %2066 = vmatpush1.msra.mxu0 0.0
        %2067 = vmatprep.subr.mxu0 0.0
        %2068 = vmatpush1.msra.mxu0 0.0
        %2069 = vmatprep.subr.mxu0 0.0
        %2070 = vmatpush1.msra.mxu0 0.0
        %2071 = vmatprep.subr.mxu0 0.0
        %2072 = vmatpush1.msra.mxu0 0.0
        %2073 = vmatprep.subr.mxu0 0.0
        %2074 = vmatpush1.msra.mxu0 0.0
        %2075 = vmatprep.subr.mxu0 0.0
        %2076 = vmatpush1.msra.mxu0 0.0
        %2077 = vmatprep.subr.mxu0 0.0
        %2078 = vmatpush1.msra.mxu0 0.0
        %2079 = vmatprep.subr.mxu0 0.0
        %2080 = vmatpush1.msra.mxu0 0.0
        %2081 = vmatprep.subr.mxu0 0.0
        %2082 = vmatpush1.msra.mxu0 0.0
        %2083 = vmatprep.subr.mxu0 0.0
        %2084 = vmatpush1.msra.mxu0 0.0
        %2085 = vmatprep.subr.mxu0 0.0
        %2086 = vmatpush1.msra.mxu0 0.0
        %2087 = vmatprep.subr.mxu0 0.0
        %2088 = vmatpush1.msra.mxu0 0.0
        %2089 = vmatprep.subr.mxu0 0.0
        %2090 = vmatpush1.msra.mxu0 0.0
        %2091 = vmatprep.subr.mxu0 0.0
        %2092 = vmatpush1.msra.mxu0 0.0
        %2093 = vmatprep.subr.mxu0 0.0
        %2094 = vmatpush1.msra.mxu0 0.0
        %2095 = vmatprep.subr.mxu0 0.0
        %2096 = vmatpush1.msra.mxu0 0.0
        %2097 = vmatprep.subr.mxu0 0.0
        %2098 = vmatpush1.msra.mxu0 0.0
        %2099 = vmatprep.subr.mxu0 0.0
        %2100 = vmatpush1.msra.mxu0 0.0
        %2101 = vmatprep.subr.mxu0 0.0
        %2102 = vmatpush1.msra.mxu0 0.0
        %2103 = vmatprep.subr.mxu0 0.0
        %2104 = vmatpush1.msra.mxu0 0.0
        %2105 = vmatprep.mubr.f32.mxu0 0.0
        %v2106 = vand.u32 %v1916, 4294901760
        %2107 = vmatmul.mubr.f32.gmra.mrb[0].mxu0 %v2106
        %v2108 = vpop.f32.mrb[0].mxu0
        %v2109 = vadd.f32 %v1998, %v2108
        %v2110 = vpop.f32.mrb[0].mxu0
        %2111 = vdwg.mxu0
        %2112 = vmatprep.subr.mxu0 0.0
        %v2113 = vand.u32 %v1902, 4294901760
        %v2114 = vsub.f32 %v1902, %v2113
        %2115 = vmatpush1.msra.mxu0 %v2114
        %2116 = vmatprep.subr.mxu0 0.0
        %v2117 = vand.u32 %v1903, 4294901760
        %v2118 = vsub.f32 %v1903, %v2117
        %2119 = vmatpush1.msra.mxu0 %v2118
        %2120 = vmatprep.subr.mxu0 0.0
        %v2121 = vand.u32 %v1904, 4294901760
        %v2122 = vsub.f32 %v1904, %v2121
        %2123 = vmatpush1.msra.mxu0 %v2122
        %2124 = vmatprep.subr.mxu0 0.0
        %v2125 = vand.u32 %v1905, 4294901760
        %v2126 = vsub.f32 %v1905, %v2125
        %2127 = vmatpush1.msra.mxu0 %v2126
        %2128 = vmatprep.subr.mxu0 0.0
        %v2129 = vand.u32 %v1906, 4294901760
        %v2130 = vsub.f32 %v1906, %v2129
        %2131 = vmatpush1.msra.mxu0 %v2130
        %2132 = vmatprep.subr.mxu0 0.0
        %v2133 = vand.u32 %v1907, 4294901760
        %v2134 = vsub.f32 %v1907, %v2133
        %2135 = vmatpush1.msra.mxu0 %v2134
        %2136 = vmatprep.subr.mxu0 0.0
        %v2137 = vand.u32 %v1908, 4294901760
        %v2138 = vsub.f32 %v1908, %v2137
        %2139 = vmatpush1.msra.mxu0 %v2138
        %2140 = vmatprep.subr.mxu0 0.0
        %v2141 = vand.u32 %v1909, 4294901760
        %v2142 = vsub.f32 %v1909, %v2141
        %2143 = vmatpush1.msra.mxu0 %v2142
        %2144 = vmatprep.subr.mxu0 0.0
        %2145 = vmatpush1.msra.mxu0 0.0
        %2146 = vmatprep.subr.mxu0 0.0
        %2147 = vmatpush1.msra.mxu0 0.0
        %2148 = vmatprep.subr.mxu0 0.0
        %2149 = vmatpush1.msra.mxu0 0.0
        %2150 = vmatprep.subr.mxu0 0.0
        %2151 = vmatpush1.msra.mxu0 0.0
        %2152 = vmatprep.subr.mxu0 0.0
        %2153 = vmatpush1.msra.mxu0 0.0
        %2154 = vmatprep.subr.mxu0 0.0
        %2155 = vmatpush1.msra.mxu0 0.0
        %2156 = vmatprep.subr.mxu0 0.0
        %2157 = vmatpush1.msra.mxu0 0.0
        %2158 = vmatprep.subr.mxu0 0.0
        %2159 = vmatpush1.msra.mxu0 0.0
        %2160 = vmatprep.subr.mxu0 0.0
        %2161 = vmatpush1.msra.mxu0 0.0
        %2162 = vmatprep.subr.mxu0 0.0
        %2163 = vmatpush1.msra.mxu0 0.0
        %2164 = vmatprep.subr.mxu0 0.0
        %2165 = vmatpush1.msra.mxu0 0.0
        %2166 = vmatprep.subr.mxu0 0.0
        %2167 = vmatpush1.msra.mxu0 0.0
        %2168 = vmatprep.subr.mxu0 0.0
        %2169 = vmatpush1.msra.mxu0 0.0
        %2170 = vmatprep.subr.mxu0 0.0
        %2171 = vmatpush1.msra.mxu0 0.0
        %2172 = vmatprep.subr.mxu0 0.0
        %2173 = vmatpush1.msra.mxu0 0.0
        %2174 = vmatprep.subr.mxu0 0.0
        %2175 = vmatpush1.msra.mxu0 0.0
        %2176 = vmatprep.subr.mxu0 0.0
        %2177 = vmatpush1.msra.mxu0 0.0
        %2178 = vmatprep.subr.mxu0 0.0
        %2179 = vmatpush1.msra.mxu0 0.0
        %2180 = vmatprep.subr.mxu0 0.0
        %2181 = vmatpush1.msra.mxu0 0.0
        %2182 = vmatprep.subr.mxu0 0.0
        %2183 = vmatpush1.msra.mxu0 0.0
        %2184 = vmatprep.subr.mxu0 0.0
        %2185 = vmatpush1.msra.mxu0 0.0
        %2186 = vmatprep.subr.mxu0 0.0
        %2187 = vmatpush1.msra.mxu0 0.0
        %2188 = vmatprep.subr.mxu0 0.0
        %2189 = vmatpush1.msra.mxu0 0.0
        %2190 = vmatprep.subr.mxu0 0.0
        %2191 = vmatpush1.msra.mxu0 0.0
        %2192 = vmatprep.mubr.f32.mxu0 0.0
        %v2193 = vand.u32 %v1916, 4294901760
        %v2194 = vsub.f32 %v1916, %v2193
        %2195 = vmatmul.mubr.f32.gmra.mrb[0].mxu0 %v2194
        %v2196 = vpop.f32.mrb[0].mxu0
        %v2197 = vadd.f32 %v2109, %v2196
        %v2198 = vpop.f32.mrb[0].mxu0
        %2199 = vdwg.mxu0
        %2200 = vmatprep.subr.mxu0 0.0
        %v2201 = vand.u32 %v1902, 4294901760
        %2202 = vmatpush1.msra.mxu0 %v2201
        %2203 = vmatprep.subr.mxu0 0.0
        %v2204 = vand.u32 %v1903, 4294901760
        %2205 = vmatpush1.msra.mxu0 %v2204
        %2206 = vmatprep.subr.mxu0 0.0
        %v2207 = vand.u32 %v1904, 4294901760
        %2208 = vmatpush1.msra.mxu0 %v2207
        %2209 = vmatprep.subr.mxu0 0.0
        %v2210 = vand.u32 %v1905, 4294901760
        %2211 = vmatpush1.msra.mxu0 %v2210
        %2212 = vmatprep.subr.mxu0 0.0
        %v2213 = vand.u32 %v1906, 4294901760
        %2214 = vmatpush1.msra.mxu0 %v2213
        %2215 = vmatprep.subr.mxu0 0.0
        %v2216 = vand.u32 %v1907, 4294901760
        %2217 = vmatpush1.msra.mxu0 %v2216
        %2218 = vmatprep.subr.mxu0 0.0
        %v2219 = vand.u32 %v1908, 4294901760
        %2220 = vmatpush1.msra.mxu0 %v2219
        %2221 = vmatprep.subr.mxu0 0.0
        %v2222 = vand.u32 %v1909, 4294901760
        %2223 = vmatpush1.msra.mxu0 %v2222
        %2224 = vmatprep.subr.mxu0 0.0
        %2225 = vmatpush1.msra.mxu0 0.0
        %2226 = vmatprep.subr.mxu0 0.0
        %2227 = vmatpush1.msra.mxu0 0.0
        %2228 = vmatprep.subr.mxu0 0.0
        %2229 = vmatpush1.msra.mxu0 0.0
        %2230 = vmatprep.subr.mxu0 0.0
        %2231 = vmatpush1.msra.mxu0 0.0
        %2232 = vmatprep.subr.mxu0 0.0
        %2233 = vmatpush1.msra.mxu0 0.0
        %2234 = vmatprep.subr.mxu0 0.0
        %2235 = vmatpush1.msra.mxu0 0.0
        %2236 = vmatprep.subr.mxu0 0.0
        %2237 = vmatpush1.msra.mxu0 0.0
        %2238 = vmatprep.subr.mxu0 0.0
        %2239 = vmatpush1.msra.mxu0 0.0
        %2240 = vmatprep.subr.mxu0 0.0
        %2241 = vmatpush1.msra.mxu0 0.0
        %2242 = vmatprep.subr.mxu0 0.0
        %2243 = vmatpush1.msra.mxu0 0.0
        %2244 = vmatprep.subr.mxu0 0.0
        %2245 = vmatpush1.msra.mxu0 0.0
        %2246 = vmatprep.subr.mxu0 0.0
        %2247 = vmatpush1.msra.mxu0 0.0
        %2248 = vmatprep.subr.mxu0 0.0
        %2249 = vmatpush1.msra.mxu0 0.0
        %2250 = vmatprep.subr.mxu0 0.0
        %2251 = vmatpush1.msra.mxu0 0.0
        %2252 = vmatprep.subr.mxu0 0.0
        %2253 = vmatpush1.msra.mxu0 0.0
        %2254 = vmatprep.subr.mxu0 0.0
        %2255 = vmatpush1.msra.mxu0 0.0
        %2256 = vmatprep.subr.mxu0 0.0
        %2257 = vmatpush1.msra.mxu0 0.0
        %2258 = vmatprep.subr.mxu0 0.0
        %2259 = vmatpush1.msra.mxu0 0.0
        %2260 = vmatprep.subr.mxu0 0.0
        %2261 = vmatpush1.msra.mxu0 0.0
        %2262 = vmatprep.subr.mxu0 0.0
        %2263 = vmatpush1.msra.mxu0 0.0
        %2264 = vmatprep.subr.mxu0 0.0
        %2265 = vmatpush1.msra.mxu0 0.0
        %2266 = vmatprep.subr.mxu0 0.0
        %2267 = vmatpush1.msra.mxu0 0.0
        %2268 = vmatprep.subr.mxu0 0.0
        %2269 = vmatpush1.msra.mxu0 0.0
        %2270 = vmatprep.subr.mxu0 0.0
        %2271 = vmatpush1.msra.mxu0 0.0
        %2272 = vmatprep.mubr.f32.mxu0 0.0
        %v2273 = vand.u32 %v1916, 4294901760
        %v2274 = vsub.f32 %v1916, %v2273
        %v2275 = vand.u32 %v2274, 4294901760
        %2276 = vmatmul.mubr.f32.gmra.mrb[0].mxu0 %v2275
        %v2277 = vpop.f32.mrb[0].mxu0
        %v2278 = vadd.f32 %v2197, %v2277
        %v2279 = vpop.f32.mrb[0].mxu0
        %2280 = vdwg.mxu0
        %2281 = vmatprep.subr.mxu0 0.0
        %v2282 = vand.u32 %v1902, 4294901760
        %v2283 = vsub.f32 %v1902, %v2282
        %v2284 = vand.u32 %v2283, 4294901760
        %2285 = vmatpush1.msra.mxu0 %v2284
        %2286 = vmatprep.subr.mxu0 0.0
        %v2287 = vand.u32 %v1903, 4294901760
        %v2288 = vsub.f32 %v1903, %v2287
        %v2289 = vand.u32 %v2288, 4294901760
        %2290 = vmatpush1.msra.mxu0 %v2289
        %2291 = vmatprep.subr.mxu0 0.0
        %v2292 = vand.u32 %v1904, 4294901760
        %v2293 = vsub.f32 %v1904, %v2292
        %v2294 = vand.u32 %v2293, 4294901760
        %2295 = vmatpush1.msra.mxu0 %v2294
        %2296 = vmatprep.subr.mxu0 0.0
        %v2297 = vand.u32 %v1905, 4294901760
        %v2298 = vsub.f32 %v1905, %v2297
        %v2299 = vand.u32 %v2298, 4294901760
        %2300 = vmatpush1.msra.mxu0 %v2299
        %2301 = vmatprep.subr.mxu0 0.0
        %v2302 = vand.u32 %v1906, 4294901760
        %v2303 = vsub.f32 %v1906, %v2302
        %v2304 = vand.u32 %v2303, 4294901760
        %2305 = vmatpush1.msra.mxu0 %v2304
        %2306 = vmatprep.subr.mxu0 0.0
        %v2307 = vand.u32 %v1907, 4294901760
        %v2308 = vsub.f32 %v1907, %v2307
        %v2309 = vand.u32 %v2308, 4294901760
        %2310 = vmatpush1.msra.mxu0 %v2309
        %2311 = vmatprep.subr.mxu0 0.0
        %v2312 = vand.u32 %v1908, 4294901760
        %v2313 = vsub.f32 %v1908, %v2312
        %v2314 = vand.u32 %v2313, 4294901760
        %2315 = vmatpush1.msra.mxu0 %v2314
        %2316 = vmatprep.subr.mxu0 0.0
        %v2317 = vand.u32 %v1909, 4294901760
        %v2318 = vsub.f32 %v1909, %v2317
        %v2319 = vand.u32 %v2318, 4294901760
        %2320 = vmatpush1.msra.mxu0 %v2319
        %2321 = vmatprep.subr.mxu0 0.0
        %2322 = vmatpush1.msra.mxu0 0.0
        %2323 = vmatprep.subr.mxu0 0.0
        %2324 = vmatpush1.msra.mxu0 0.0
        %2325 = vmatprep.subr.mxu0 0.0
        %2326 = vmatpush1.msra.mxu0 0.0
        %2327 = vmatprep.subr.mxu0 0.0
        %2328 = vmatpush1.msra.mxu0 0.0
        %2329 = vmatprep.subr.mxu0 0.0
        %2330 = vmatpush1.msra.mxu0 0.0
        %2331 = vmatprep.subr.mxu0 0.0
        %2332 = vmatpush1.msra.mxu0 0.0
        %2333 = vmatprep.subr.mxu0 0.0
        %2334 = vmatpush1.msra.mxu0 0.0
        %2335 = vmatprep.subr.mxu0 0.0
        %2336 = vmatpush1.msra.mxu0 0.0
        %2337 = vmatprep.subr.mxu0 0.0
        %2338 = vmatpush1.msra.mxu0 0.0
        %2339 = vmatprep.subr.mxu0 0.0
        %2340 = vmatpush1.msra.mxu0 0.0
        %2341 = vmatprep.subr.mxu0 0.0
        %2342 = vmatpush1.msra.mxu0 0.0
        %2343 = vmatprep.subr.mxu0 0.0
        %2344 = vmatpush1.msra.mxu0 0.0
        %2345 = vmatprep.subr.mxu0 0.0
        %2346 = vmatpush1.msra.mxu0 0.0
        %2347 = vmatprep.subr.mxu0 0.0
        %2348 = vmatpush1.msra.mxu0 0.0
        %2349 = vmatprep.subr.mxu0 0.0
        %2350 = vmatpush1.msra.mxu0 0.0
        %2351 = vmatprep.subr.mxu0 0.0
        %2352 = vmatpush1.msra.mxu0 0.0
        %2353 = vmatprep.subr.mxu0 0.0
        %2354 = vmatpush1.msra.mxu0 0.0
        %2355 = vmatprep.subr.mxu0 0.0
        %2356 = vmatpush1.msra.mxu0 0.0
        %2357 = vmatprep.subr.mxu0 0.0
        %2358 = vmatpush1.msra.mxu0 0.0
        %2359 = vmatprep.subr.mxu0 0.0
        %2360 = vmatpush1.msra.mxu0 0.0
        %2361 = vmatprep.subr.mxu0 0.0
        %2362 = vmatpush1.msra.mxu0 0.0
        %2363 = vmatprep.subr.mxu0 0.0
        %2364 = vmatpush1.msra.mxu0 0.0
        %2365 = vmatprep.subr.mxu0 0.0
        %2366 = vmatpush1.msra.mxu0 0.0
        %2367 = vmatprep.subr.mxu0 0.0
        %2368 = vmatpush1.msra.mxu0 0.0
        %2369 = vmatprep.mubr.f32.mxu0 0.0
        %v2370 = vand.u32 %v1916, 4294901760
        %2371 = vmatmul.mubr.f32.gmra.mrb[0].mxu0 %v2370
        %v2372 = vpop.f32.mrb[0].mxu0
        %v2373 = vadd.f32 %v2278, %v2372
        %v2374 = vpop.f32.mrb[0].mxu0
        %2375 = vdwg.mxu0
        %2376 = vmatprep.subr.mxu0 0.0
        %v2377 = vand.u32 %v1902, 4294901760
        %2378 = vmatpush1.msra.mxu0 %v2377
        %2379 = vmatprep.subr.mxu0 0.0
        %v2380 = vand.u32 %v1903, 4294901760
        %2381 = vmatpush1.msra.mxu0 %v2380
        %2382 = vmatprep.subr.mxu0 0.0
        %v2383 = vand.u32 %v1904, 4294901760
        %2384 = vmatpush1.msra.mxu0 %v2383
        %2385 = vmatprep.subr.mxu0 0.0
        %v2386 = vand.u32 %v1905, 4294901760
        %2387 = vmatpush1.msra.mxu0 %v2386
        %2388 = vmatprep.subr.mxu0 0.0
        %v2389 = vand.u32 %v1906, 4294901760
        %2390 = vmatpush1.msra.mxu0 %v2389
        %2391 = vmatprep.subr.mxu0 0.0
        %v2392 = vand.u32 %v1907, 4294901760
        %2393 = vmatpush1.msra.mxu0 %v2392
        %2394 = vmatprep.subr.mxu0 0.0
        %v2395 = vand.u32 %v1908, 4294901760
        %2396 = vmatpush1.msra.mxu0 %v2395
        %2397 = vmatprep.subr.mxu0 0.0
        %v2398 = vand.u32 %v1909, 4294901760
        %2399 = vmatpush1.msra.mxu0 %v2398
        %2400 = vmatprep.subr.mxu0 0.0
        %2401 = vmatpush1.msra.mxu0 0.0
        %2402 = vmatprep.subr.mxu0 0.0
        %2403 = vmatpush1.msra.mxu0 0.0
        %2404 = vmatprep.subr.mxu0 0.0
        %2405 = vmatpush1.msra.mxu0 0.0
        %2406 = vmatprep.subr.mxu0 0.0
        %2407 = vmatpush1.msra.mxu0 0.0
        %2408 = vmatprep.subr.mxu0 0.0
        %2409 = vmatpush1.msra.mxu0 0.0
        %2410 = vmatprep.subr.mxu0 0.0
        %2411 = vmatpush1.msra.mxu0 0.0
        %2412 = vmatprep.subr.mxu0 0.0
        %2413 = vmatpush1.msra.mxu0 0.0
        %2414 = vmatprep.subr.mxu0 0.0
        %2415 = vmatpush1.msra.mxu0 0.0
        %2416 = vmatprep.subr.mxu0 0.0
        %2417 = vmatpush1.msra.mxu0 0.0
        %2418 = vmatprep.subr.mxu0 0.0
        %2419 = vmatpush1.msra.mxu0 0.0
        %2420 = vmatprep.subr.mxu0 0.0
        %2421 = vmatpush1.msra.mxu0 0.0
        %2422 = vmatprep.subr.mxu0 0.0
        %2423 = vmatpush1.msra.mxu0 0.0
        %2424 = vmatprep.subr.mxu0 0.0
        %2425 = vmatpush1.msra.mxu0 0.0
        %2426 = vmatprep.subr.mxu0 0.0
        %2427 = vmatpush1.msra.mxu0 0.0
        %2428 = vmatprep.subr.mxu0 0.0
        %2429 = vmatpush1.msra.mxu0 0.0
        %2430 = vmatprep.subr.mxu0 0.0
        %2431 = vmatpush1.msra.mxu0 0.0
        %2432 = vmatprep.subr.mxu0 0.0
        %2433 = vmatpush1.msra.mxu0 0.0
        %2434 = vmatprep.subr.mxu0 0.0
        %2435 = vmatpush1.msra.mxu0 0.0
        %2436 = vmatprep.subr.mxu0 0.0
        %2437 = vmatpush1.msra.mxu0 0.0
        %2438 = vmatprep.subr.mxu0 0.0
        %2439 = vmatpush1.msra.mxu0 0.0
        %2440 = vmatprep.subr.mxu0 0.0
        %2441 = vmatpush1.msra.mxu0 0.0
        %2442 = vmatprep.subr.mxu0 0.0
        %2443 = vmatpush1.msra.mxu0 0.0
        %2444 = vmatprep.subr.mxu0 0.0
        %2445 = vmatpush1.msra.mxu0 0.0
        %2446 = vmatprep.subr.mxu0 0.0
        %2447 = vmatpush1.msra.mxu0 0.0
        %2448 = vmatprep.mubr.f32.mxu0 0.0
        %v2449 = vand.u32 %v1916, 4294901760
        %2450 = vmatmul.mubr.f32.gmra.mrb[0].mxu0 %v2449
        %v2451 = vpop.f32.mrb[0].mxu0
        %v2452 = vadd.f32 %v2373, %v2451
        %v2453 = vpop.f32.mrb[0].mxu0
        %2454 = vdwg.mxu0
        %2456 = vrot.lane.b32.xlu0 %v2452, 96
        %v2457 = vpop.permute.xlu0 %2456
        %vm2459 = vcmask 1048320
        %2460 = vst.msk [vmem:[%s193] sm:$0xff] %vm2459, %v2457
        %s2461 = sand.u32 %s114, 1
        %s2462 = scalar_lea.sflag [#allocation3], %s2461
        %s2463 = sand.u32 %s114, 1
        %s2464 = smul.addr %s2463, 8
        %s2465 = scalar_lea.vmem [#allocation2], %s2464
        // Predicated region
        $region33: #{tpu_custom_call.1} parent=31 // pred_check
          %p2466 = pneg %p124
        $region34: #{tpu_custom_call.1} parent=31 // pred_check_branch
          %2468 = sbr.rel (%p2466) target = $region36
        $region35: #{tpu_custom_call.1} parent=31 // pred_region
          %s2469 = sadd.s32 %s22, %s21
          %s2471 = ssub.s32 128, 128
          %2472 = vsyncadd %s2462, %s2471
          %s2473 = smul.addr %s2469, 128
          %s2474 = scalar_lea.hbm %s3, %s2473
          %s2476 = sshll.u32 %s2465, 4
          %s2477 = int_to_ptr.vmem [resolvable:$true] %s2476
          %2479 = dma.vmem_to_hbm [thread:$0]  %s2477, 128, %s2474, %s2462
        $region36: #{tpu_custom_call.1} parent=31 // pred_fallthru
          _
      $region32: #{tpu_custom_call.1} parent=5 // pred_fallthru
        _
      %p2480 = scmp.le.s32.totalorder 2, %s12
      // Predicated region
      $region37: #{tpu_custom_call.1} parent=5 // pred_check
        %p2481 = pneg %p2480
      $region38: #{tpu_custom_call.1} parent=5 // pred_check_branch
        %2483 = sbr.rel (%p2481) target = $region40
      $region39: #{tpu_custom_call.1} parent=5 // pred_region
        %s2484 = ssub.s32 %s12, 2
        // Predicated region
        $region41: #{tpu_custom_call.1} parent=39 // pred_check
          %p2485 = pneg %p130
        $region42: #{tpu_custom_call.1} parent=39 // pred_check_branch
          %2487 = sbr.rel (%p2485) target = $region44
        $region43: #{tpu_custom_call.1} parent=39 // pred_region
          %s2488 = sand.u32 %s115, 1
          %s2489 = scalar_lea.sflag [#allocation3], %s2488
          %s2490 = sand.u32 %s115, 1
          %s2491 = smul.addr %s2490, 8
          %s2492 = scalar_lea.vmem [#allocation2], %s2491
          %2493 = dma.done %s2489, 128
        $region44: #{tpu_custom_call.1} parent=39 // pred_fallthru
          _
      $region40: #{tpu_custom_call.1} parent=5 // pred_fallthru
        _
    $region6: #{tpu_custom_call.1} parent=1 // loop_footer
      %s16 = sadd.s32 1, %s12
    $region7: #{tpu_custom_call.1} parent=1 // loop_footer_branch
      %11 = sbr.rel target = $region3
    $region8: #{tpu_custom_call.1} parent=1 // loop_exit
      _
    %2494 = vsyncpa [#allocation3], 1
    %s2495 = scalar_lea.sflag [#allocation3], 1
    %2496 = vsyncpa %s2495, 1

</llo_original>
